<compile_context>
chip_gen: v5e
topology: v5e:2x2
jax: 0.10.0
libtpu: 0.0.40
codegen_flags: <defaults>
</compile_context>

<pallas_src>
import jax
import jax.numpy as jnp
import numpy as np
from jax.experimental import pallas as pl
from jax.experimental.pallas import tpu as pltpu  # noqa: F401  (TPU backend assumed)

EPS = 1e-5
NEG_SLOPE = 0.01


def _full_spec(shape):
    # Whole-array block (no grid); everything fits easily in VMEM at these sizes.
    return pl.BlockSpec(shape, lambda *_, _nd=len(shape): (0,) * _nd)


# ----------------------------- fused kernel -----------------------------------


def make_encoder_kernel(num_layers, latent_len):
    """Kernel refs (in order): x_rows,
       per conv layer: W_taps (3,Cin,Cout), S_taps (3,B*Lout,B*Lin), bgb (3,1,Cout),
       then: lin_b (1,latent_dim), E_pack (latent_len,B,B*latent_len),
             Wl_pack (latent_len,C_last,latent_dim),
       output (B, latent_dim)."""

    def kernel(*refs):
        o_ref = refs[-1]
        it = iter(refs[:-1])
        h = next(it)[...]                                     # (B*L, Cin)
        for _ in range(num_layers):
            w_ref = next(it)                                  # (3, Cin, Cout)
            s_ref = next(it)                                  # (3, B*Lout, B*Lin)
            bgb_ref = next(it)                                # (3, 1, Cout): b, gamma, beta
            pre = bgb_ref[0]                                  # conv bias, (1, Cout)
            for k in range(3):
                # stride-2 / +-1-tap row gather via 0/1 selection matmul, then project
                g = jnp.dot(s_ref[k], h, preferred_element_type=jnp.float32)
                pre = pre + jnp.dot(g, w_ref[k], preferred_element_type=jnp.float32)
            # BatchNorm1d (training mode), one-pass biased stats over all rows
            inv_n = 1.0 / pre.shape[0]
            mean = jnp.sum(pre, axis=0, keepdims=True) * inv_n
            msq = jnp.sum(pre * pre, axis=0, keepdims=True) * inv_n
            var = msq - mean * mean
            scale = bgb_ref[1] * jax.lax.rsqrt(var + EPS)
            y = (pre - mean) * scale + bgb_ref[2]
            # LeakyReLU
            h = jnp.where(y >= 0, y, NEG_SLOPE * y)
        # Linear on the channel-major NCL flatten, folded into per-position weights W_l
        bl_ref = next(it)                                     # (1, latent_dim)
        e_ref = next(it)                                      # (latent_len, B, B*latent_len)
        wl_ref = next(it)                                     # (latent_len, C_last, latent_dim)
        y = bl_ref[...]
        for l in range(latent_len):
            y = y + jnp.dot(
                jnp.dot(e_ref[l], h, preferred_element_type=jnp.float32),
                wl_ref[l], preferred_element_type=jnp.float32)
        o_ref[...] = y                                        # (B, latent_dim)

    return kernel


# ----------------------------- host-side prep ---------------------------------


def _sel_matrices(B, L_in):
    """Stacked selection matrices (3, B*L_out, B*L_in) for Conv1d(k=3, stride=2, pad=1)
    taps 2t-1, 2t, 2t+1 on flattened (B, L) rows; out-of-range taps (zero padding)
    simply get no 1-entry."""
    L_out = (L_in - 1) // 2 + 1
    S = np.zeros((3, B * L_out, B * L_in), np.float32)
    for b in range(B):
        for t in range(L_out):
            r = b * L_out + t
            for k in range(3):
                src = 2 * t - 1 + k
                if 0 <= src < L_in:
                    S[k, r, b * L_in + src] = 1.0
    return S, L_out


def build_encoder_fn(params, B, seq_dim, seq_len, hidden_size_list, latent_dim):
    num_layers = len(hidden_size_list)
    prep = []
    L = seq_len
    for i in range(num_layers):
        p = params["enc"][i]
        w = np.asarray(p["w"], np.float32)            # (Cout, Cin, 3)  PyTorch layout
        Cout = w.shape[0]
        W_taps = np.ascontiguousarray(np.transpose(w, (2, 1, 0)))   # (3, Cin, Cout)
        S_taps, L_out = _sel_matrices(B, L)
        bgb = np.stack([np.asarray(p["b"], np.float32),
                        np.asarray(p["gamma"], np.float32),
                        np.asarray(p["beta"], np.float32)]).reshape(3, 1, Cout)
        prep += [jnp.asarray(W_taps), jnp.asarray(S_taps), jnp.asarray(bgb)]
        L = L_out

    latent_len = L
    C_last = hidden_size_list[-1]
    N_last = B * latent_len
    W_lin = np.asarray(params["lin_w"], np.float32)   # (latent_dim, C_last*latent_len)
    b_lin = np.asarray(params["lin_b"], np.float32)
    E_pack = np.zeros((latent_len, B, N_last), np.float32)
    Wl_pack = np.zeros((latent_len, C_last, latent_dim), np.float32)
    for l in range(latent_len):
        for b in range(B):
            E_pack[l, b, b * latent_len + l] = 1.0
        # PyTorch flatten(start_dim=1) of NCL is channel-major: flat index = c*latent_len + l
        Wl_pack[l] = W_lin[:, l::latent_len].T        # (C_last, latent_dim)
    prep += [jnp.asarray(b_lin.reshape(1, latent_dim)),
             jnp.asarray(E_pack), jnp.asarray(Wl_pack)]

    in_shapes = [(B * seq_len, seq_dim)] + [tuple(a.shape) for a in prep]
    call = pl.pallas_call(
        make_encoder_kernel(num_layers, latent_len),
        out_shape=jax.ShapeDtypeStruct((B, latent_dim), jnp.float32),
        in_specs=[_full_spec(s) for s in in_shapes],
        out_specs=_full_spec((B, latent_dim)),
    )

    @jax.jit
    def forward(x):                                   # x: (B, seq_dim, seq_len) NCL
        x_rows = jnp.transpose(x, (0, 2, 1)).reshape(B * seq_len, seq_dim)
        return call(x_rows, *prep)

    return forward


# ----------------------------- params & numpy reference -----------------------


def init_params(key, seq_len, seq_dim, latent_dim, hidden_size_list):
    ks = iter(jax.random.split(key, 64))

    def nrm(shape, scale=0.1):
        return scale * jax.random.normal(next(ks), shape, dtype=jnp.float32)

    params = {"enc": []}
    in_dim = seq_dim
    L = seq_len
    for h in hidden_size_list:
        params["enc"].append(dict(w=nrm((h, in_dim, 3)), b=nrm((h,)),
                                  gamma=1.0 + nrm((h,)), beta=nrm((h,))))
        in_dim = h
        L //= 2
    params["lin_w"] = nrm((latent_dim, hidden_size_list[-1] * L))
    params["lin_b"] = nrm((latent_dim,))
    return params, L


def ref_conv_s2(x, w, b):  # x: (B, Cin, L) NCL, w: (Cout, Cin, 3); stride 2, pad 1
    B, Cin, L = x.shape
    Lout = (L - 1) // 2 + 1
    xp = np.pad(x, ((0, 0), (0, 0), (1, 1)))
    out = np.tile(b[None, :, None], (B, 1, Lout)).astype(np.float32)
    for k in range(3):
        out += np.einsum("bil,oi->bol", xp[:, :, k:k + 2 * Lout:2], w[:, :, k])
    return out


def ref_bn_lrelu(x, gamma, beta):  # x: (B, C, L), training-mode BN (biased var)
    mean = x.mean(axis=(0, 2), keepdims=True)
    var = x.var(axis=(0, 2), keepdims=True)
    y = (x - mean) / np.sqrt(var + EPS) * gamma[None, :, None] + beta[None, :, None]
    return np.where(y >= 0, y, NEG_SLOPE * y)


def ref_forward(x, params):
    h = np.asarray(x, np.float32)
    for p in params["enc"]:
        h = ref_conv_s2(h, np.asarray(p["w"]), np.asarray(p["b"]))
        h = ref_bn_lrelu(h, np.asarray(p["gamma"]), np.asarray(p["beta"]))
    flat = h.reshape(h.shape[0], -1)  # NCL flatten(start_dim=1): channel-major
    return flat @ np.asarray(params["lin_w"]).T + np.asarray(params["lin_b"])


# ----------------------------- main -------------------------------------------

if __name__ == "__main__":
    seq_len, seq_dim, latent_dim = 16, 4, 32
    hidden_size_list = [64, 128, 256]
    B = 2

    key = jax.random.PRNGKey(0)
    kx, kp = jax.random.split(key)
    params, latent_seq_len = init_params(kp, seq_len, seq_dim, latent_dim, hidden_size_list)
    x = jax.random.normal(kx, (B, seq_dim, seq_len), dtype=jnp.float32)

    forward = build_encoder_fn(params, B, seq_dim, seq_len, hidden_size_list, latent_dim)
    out = jax.block_until_ready(forward(x))

    assert out.shape == (B, latent_dim), out.shape
    ref = ref_forward(x, params)
    np.testing.assert_allclose(np.asarray(out), ref, rtol=2e-4, atol=2e-4)
    # TODO(synk): BatchNorm running-statistics buffer updates (a training-mode side effect)
    # are not modeled; they do not affect the forward output.
    print("KERNEL_OK")
</pallas_src>

<mosaic_0001>
module attributes {stable_mosaic.version = 11 : i64} {
  func.func @kernel(%arg0: memref<32x4xf32, #tpu.memory_space<vmem>>, %arg1: memref<3x4x64xf32, #tpu.memory_space<vmem>>, %arg2: memref<3x16x32xf32, #tpu.memory_space<vmem>>, %arg3: memref<3x1x64xf32, #tpu.memory_space<vmem>>, %arg4: memref<3x64x128xf32, #tpu.memory_space<vmem>>, %arg5: memref<3x8x16xf32, #tpu.memory_space<vmem>>, %arg6: memref<3x1x128xf32, #tpu.memory_space<vmem>>, %arg7: memref<3x128x256xf32, #tpu.memory_space<vmem>>, %arg8: memref<3x4x8xf32, #tpu.memory_space<vmem>>, %arg9: memref<3x1x256xf32, #tpu.memory_space<vmem>>, %arg10: memref<1x32xf32, #tpu.memory_space<vmem>>, %arg11: memref<2x2x4xf32, #tpu.memory_space<vmem>>, %arg12: memref<2x256x32xf32, #tpu.memory_space<vmem>>, %arg13: memref<2x32xf32, #tpu.memory_space<vmem>>) attributes {dimension_semantics = [], scalar_prefetch = 0 : i64, scratch_operands = 0 : i64, tpu.core_type = #tpu.core_type<tc>} {
    %c0 = arith.constant 0 : index
    %c0_0 = arith.constant 0 : index
    %0 = vector.load %arg0[%c0, %c0_0] : memref<32x4xf32, #tpu.memory_space<vmem>>, vector<32x4xf32>
    %c0_1 = arith.constant 0 : index
    %c0_2 = arith.constant 0 : index
    %c0_3 = arith.constant 0 : index
    %1 = vector.load %arg3[%c0_1, %c0_2, %c0_3] : memref<3x1x64xf32, #tpu.memory_space<vmem>>, vector<1x1x64xf32>
    %2 = vector.shape_cast %1 : vector<1x1x64xf32> to vector<1x64xf32>
    %c0_4 = arith.constant 0 : index
    %c0_5 = arith.constant 0 : index
    %c0_6 = arith.constant 0 : index
    %3 = vector.load %arg2[%c0_4, %c0_5, %c0_6] : memref<3x16x32xf32, #tpu.memory_space<vmem>>, vector<1x16x32xf32>
    %4 = vector.shape_cast %3 : vector<1x16x32xf32> to vector<16x32xf32>
    %cst = arith.constant dense<0.000000e+00> : vector<16x4xf32>
    %5 = tpu.matmul %4, %0, %cst {dimension_numbers = #tpu.dot_dimension_numbers<[1], [0], [0], [1], [0, 0, 1, 1], [], []>} : vector<16x32xf32>, vector<32x4xf32>, vector<16x4xf32> -> vector<16x4xf32>
    %c0_7 = arith.constant 0 : index
    %c0_8 = arith.constant 0 : index
    %c0_9 = arith.constant 0 : index
    %6 = vector.load %arg1[%c0_7, %c0_8, %c0_9] : memref<3x4x64xf32, #tpu.memory_space<vmem>>, vector<1x4x64xf32>
    %7 = vector.shape_cast %6 : vector<1x4x64xf32> to vector<4x64xf32>
    %cst_10 = arith.constant dense<0.000000e+00> : vector<16x64xf32>
    %8 = tpu.matmul %5, %7, %cst_10 {dimension_numbers = #tpu.dot_dimension_numbers<[1], [0], [0], [1], [0, 0, 1, 1], [], []>} : vector<16x4xf32>, vector<4x64xf32>, vector<16x64xf32> -> vector<16x64xf32>
    %9 = vector.broadcast %2 : vector<1x64xf32> to vector<16x64xf32>
    %10 = arith.addf %9, %8 : vector<16x64xf32>
    %c1 = arith.constant 1 : index
    %c0_11 = arith.constant 0 : index
    %c0_12 = arith.constant 0 : index
    %11 = vector.load %arg2[%c1, %c0_11, %c0_12] : memref<3x16x32xf32, #tpu.memory_space<vmem>>, vector<1x16x32xf32>
    %12 = vector.shape_cast %11 : vector<1x16x32xf32> to vector<16x32xf32>
    %cst_13 = arith.constant dense<0.000000e+00> : vector<16x4xf32>
    %13 = tpu.matmul %12, %0, %cst_13 {dimension_numbers = #tpu.dot_dimension_numbers<[1], [0], [0], [1], [0, 0, 1, 1], [], []>} : vector<16x32xf32>, vector<32x4xf32>, vector<16x4xf32> -> vector<16x4xf32>
    %c1_14 = arith.constant 1 : index
    %c0_15 = arith.constant 0 : index
    %c0_16 = arith.constant 0 : index
    %14 = vector.load %arg1[%c1_14, %c0_15, %c0_16] : memref<3x4x64xf32, #tpu.memory_space<vmem>>, vector<1x4x64xf32>
    %15 = vector.shape_cast %14 : vector<1x4x64xf32> to vector<4x64xf32>
    %cst_17 = arith.constant dense<0.000000e+00> : vector<16x64xf32>
    %16 = tpu.matmul %13, %15, %cst_17 {dimension_numbers = #tpu.dot_dimension_numbers<[1], [0], [0], [1], [0, 0, 1, 1], [], []>} : vector<16x4xf32>, vector<4x64xf32>, vector<16x64xf32> -> vector<16x64xf32>
    %17 = arith.addf %10, %16 : vector<16x64xf32>
    %c2 = arith.constant 2 : index
    %c0_18 = arith.constant 0 : index
    %c0_19 = arith.constant 0 : index
    %18 = vector.load %arg2[%c2, %c0_18, %c0_19] : memref<3x16x32xf32, #tpu.memory_space<vmem>>, vector<1x16x32xf32>
    %19 = vector.shape_cast %18 : vector<1x16x32xf32> to vector<16x32xf32>
    %cst_20 = arith.constant dense<0.000000e+00> : vector<16x4xf32>
    %20 = tpu.matmul %19, %0, %cst_20 {dimension_numbers = #tpu.dot_dimension_numbers<[1], [0], [0], [1], [0, 0, 1, 1], [], []>} : vector<16x32xf32>, vector<32x4xf32>, vector<16x4xf32> -> vector<16x4xf32>
    %c2_21 = arith.constant 2 : index
    %c0_22 = arith.constant 0 : index
    %c0_23 = arith.constant 0 : index
    %21 = vector.load %arg1[%c2_21, %c0_22, %c0_23] : memref<3x4x64xf32, #tpu.memory_space<vmem>>, vector<1x4x64xf32>
    %22 = vector.shape_cast %21 : vector<1x4x64xf32> to vector<4x64xf32>
    %cst_24 = arith.constant dense<0.000000e+00> : vector<16x64xf32>
    %23 = tpu.matmul %20, %22, %cst_24 {dimension_numbers = #tpu.dot_dimension_numbers<[1], [0], [0], [1], [0, 0, 1, 1], [], []>} : vector<16x4xf32>, vector<4x64xf32>, vector<16x64xf32> -> vector<16x64xf32>
    %24 = arith.addf %17, %23 : vector<16x64xf32>
    %cst_25 = arith.constant dense<0.000000e+00> : vector<64xf32>
    %25 = vector.multi_reduction <add>, %24, %cst_25 [0] : vector<16x64xf32> to vector<64xf32>
    %26 = vector.shape_cast %25 : vector<64xf32> to vector<1x64xf32>
    %cst_26 = arith.constant 6.250000e-02 : f32
    %27 = vector.broadcast %cst_26 : f32 to vector<1x64xf32>
    %28 = arith.mulf %26, %27 : vector<1x64xf32>
    %29 = arith.mulf %24, %24 : vector<16x64xf32>
    %cst_27 = arith.constant dense<0.000000e+00> : vector<64xf32>
    %30 = vector.multi_reduction <add>, %29, %cst_27 [0] : vector<16x64xf32> to vector<64xf32>
    %31 = vector.shape_cast %30 : vector<64xf32> to vector<1x64xf32>
    %cst_28 = arith.constant 6.250000e-02 : f32
    %32 = vector.broadcast %cst_28 : f32 to vector<1x64xf32>
    %33 = arith.mulf %31, %32 : vector<1x64xf32>
    %34 = arith.mulf %28, %28 : vector<1x64xf32>
    %35 = arith.subf %33, %34 : vector<1x64xf32>
    %c1_29 = arith.constant 1 : index
    %c0_30 = arith.constant 0 : index
    %c0_31 = arith.constant 0 : index
    %36 = vector.load %arg3[%c1_29, %c0_30, %c0_31] : memref<3x1x64xf32, #tpu.memory_space<vmem>>, vector<1x1x64xf32>
    %37 = vector.shape_cast %36 : vector<1x1x64xf32> to vector<1x64xf32>
    %cst_32 = arith.constant 9.99999974E-6 : f32
    %38 = vector.broadcast %cst_32 : f32 to vector<1x64xf32>
    %39 = arith.addf %35, %38 : vector<1x64xf32>
    %40 = math.rsqrt %39 : vector<1x64xf32>
    %41 = arith.mulf %37, %40 : vector<1x64xf32>
    %42 = vector.broadcast %28 : vector<1x64xf32> to vector<16x64xf32>
    %43 = arith.subf %24, %42 : vector<16x64xf32>
    %44 = vector.broadcast %41 : vector<1x64xf32> to vector<16x64xf32>
    %45 = arith.mulf %43, %44 : vector<16x64xf32>
    %c2_33 = arith.constant 2 : index
    %c0_34 = arith.constant 0 : index
    %c0_35 = arith.constant 0 : index
    %46 = vector.load %arg3[%c2_33, %c0_34, %c0_35] : memref<3x1x64xf32, #tpu.memory_space<vmem>>, vector<1x1x64xf32>
    %47 = vector.shape_cast %46 : vector<1x1x64xf32> to vector<1x64xf32>
    %48 = vector.broadcast %47 : vector<1x64xf32> to vector<16x64xf32>
    %49 = arith.addf %45, %48 : vector<16x64xf32>
    %cst_36 = arith.constant 0.000000e+00 : f32
    %50 = vector.broadcast %cst_36 : f32 to vector<16x64xf32>
    %51 = arith.cmpf oge, %49, %50 : vector<16x64xf32>
    %cst_37 = arith.constant 0.00999999977 : f32
    %52 = vector.broadcast %cst_37 : f32 to vector<16x64xf32>
    %53 = arith.mulf %52, %49 : vector<16x64xf32>
    %54 = arith.select %51, %49, %53 : vector<16x64xi1>, vector<16x64xf32>
    %c0_38 = arith.constant 0 : index
    %c0_39 = arith.constant 0 : index
    %c0_40 = arith.constant 0 : index
    %55 = vector.load %arg6[%c0_38, %c0_39, %c0_40] : memref<3x1x128xf32, #tpu.memory_space<vmem>>, vector<1x1x128xf32>
    %56 = vector.shape_cast %55 : vector<1x1x128xf32> to vector<1x128xf32>
    %c0_41 = arith.constant 0 : index
    %c0_42 = arith.constant 0 : index
    %c0_43 = arith.constant 0 : index
    %57 = vector.load %arg5[%c0_41, %c0_42, %c0_43] : memref<3x8x16xf32, #tpu.memory_space<vmem>>, vector<1x8x16xf32>
    %58 = vector.shape_cast %57 : vector<1x8x16xf32> to vector<8x16xf32>
    %cst_44 = arith.constant dense<0.000000e+00> : vector<8x64xf32>
    %59 = tpu.matmul %58, %54, %cst_44 {dimension_numbers = #tpu.dot_dimension_numbers<[1], [0], [0], [1], [0, 0, 1, 1], [], []>} : vector<8x16xf32>, vector<16x64xf32>, vector<8x64xf32> -> vector<8x64xf32>
    %c0_45 = arith.constant 0 : index
    %c0_46 = arith.constant 0 : index
    %c0_47 = arith.constant 0 : index
    %60 = vector.load %arg4[%c0_45, %c0_46, %c0_47] : memref<3x64x128xf32, #tpu.memory_space<vmem>>, vector<1x64x128xf32>
    %61 = vector.shape_cast %60 : vector<1x64x128xf32> to vector<64x128xf32>
    %cst_48 = arith.constant dense<0.000000e+00> : vector<8x128xf32>
    %62 = tpu.matmul %59, %61, %cst_48 {dimension_numbers = #tpu.dot_dimension_numbers<[1], [0], [0], [1], [0, 0, 1, 1], [], []>} : vector<8x64xf32>, vector<64x128xf32>, vector<8x128xf32> -> vector<8x128xf32>
    %63 = vector.broadcast %56 : vector<1x128xf32> to vector<8x128xf32>
    %64 = arith.addf %63, %62 : vector<8x128xf32>
    %c1_49 = arith.constant 1 : index
    %c0_50 = arith.constant 0 : index
    %c0_51 = arith.constant 0 : index
    %65 = vector.load %arg5[%c1_49, %c0_50, %c0_51] : memref<3x8x16xf32, #tpu.memory_space<vmem>>, vector<1x8x16xf32>
    %66 = vector.shape_cast %65 : vector<1x8x16xf32> to vector<8x16xf32>
    %cst_52 = arith.constant dense<0.000000e+00> : vector<8x64xf32>
    %67 = tpu.matmul %66, %54, %cst_52 {dimension_numbers = #tpu.dot_dimension_numbers<[1], [0], [0], [1], [0, 0, 1, 1], [], []>} : vector<8x16xf32>, vector<16x64xf32>, vector<8x64xf32> -> vector<8x64xf32>
    %c1_53 = arith.constant 1 : index
    %c0_54 = arith.constant 0 : index
    %c0_55 = arith.constant 0 : index
    %68 = vector.load %arg4[%c1_53, %c0_54, %c0_55] : memref<3x64x128xf32, #tpu.memory_space<vmem>>, vector<1x64x128xf32>
    %69 = vector.shape_cast %68 : vector<1x64x128xf32> to vector<64x128xf32>
    %cst_56 = arith.constant dense<0.000000e+00> : vector<8x128xf32>
    %70 = tpu.matmul %67, %69, %cst_56 {dimension_numbers = #tpu.dot_dimension_numbers<[1], [0], [0], [1], [0, 0, 1, 1], [], []>} : vector<8x64xf32>, vector<64x128xf32>, vector<8x128xf32> -> vector<8x128xf32>
    %71 = arith.addf %64, %70 : vector<8x128xf32>
    %c2_57 = arith.constant 2 : index
    %c0_58 = arith.constant 0 : index
    %c0_59 = arith.constant 0 : index
    %72 = vector.load %arg5[%c2_57, %c0_58, %c0_59] : memref<3x8x16xf32, #tpu.memory_space<vmem>>, vector<1x8x16xf32>
    %73 = vector.shape_cast %72 : vector<1x8x16xf32> to vector<8x16xf32>
    %cst_60 = arith.constant dense<0.000000e+00> : vector<8x64xf32>
    %74 = tpu.matmul %73, %54, %cst_60 {dimension_numbers = #tpu.dot_dimension_numbers<[1], [0], [0], [1], [0, 0, 1, 1], [], []>} : vector<8x16xf32>, vector<16x64xf32>, vector<8x64xf32> -> vector<8x64xf32>
    %c2_61 = arith.constant 2 : index
    %c0_62 = arith.constant 0 : index
    %c0_63 = arith.constant 0 : index
    %75 = vector.load %arg4[%c2_61, %c0_62, %c0_63] : memref<3x64x128xf32, #tpu.memory_space<vmem>>, vector<1x64x128xf32>
    %76 = vector.shape_cast %75 : vector<1x64x128xf32> to vector<64x128xf32>
    %cst_64 = arith.constant dense<0.000000e+00> : vector<8x128xf32>
    %77 = tpu.matmul %74, %76, %cst_64 {dimension_numbers = #tpu.dot_dimension_numbers<[1], [0], [0], [1], [0, 0, 1, 1], [], []>} : vector<8x64xf32>, vector<64x128xf32>, vector<8x128xf32> -> vector<8x128xf32>
    %78 = arith.addf %71, %77 : vector<8x128xf32>
    %cst_65 = arith.constant dense<0.000000e+00> : vector<128xf32>
    %79 = vector.multi_reduction <add>, %78, %cst_65 [0] : vector<8x128xf32> to vector<128xf32>
    %80 = vector.shape_cast %79 : vector<128xf32> to vector<1x128xf32>
    %cst_66 = arith.constant 1.250000e-01 : f32
    %81 = vector.broadcast %cst_66 : f32 to vector<1x128xf32>
    %82 = arith.mulf %80, %81 : vector<1x128xf32>
    %83 = arith.mulf %78, %78 : vector<8x128xf32>
    %cst_67 = arith.constant dense<0.000000e+00> : vector<128xf32>
    %84 = vector.multi_reduction <add>, %83, %cst_67 [0] : vector<8x128xf32> to vector<128xf32>
    %85 = vector.shape_cast %84 : vector<128xf32> to vector<1x128xf32>
    %cst_68 = arith.constant 1.250000e-01 : f32
    %86 = vector.broadcast %cst_68 : f32 to vector<1x128xf32>
    %87 = arith.mulf %85, %86 : vector<1x128xf32>
    %88 = arith.mulf %82, %82 : vector<1x128xf32>
    %89 = arith.subf %87, %88 : vector<1x128xf32>
    %c1_69 = arith.constant 1 : index
    %c0_70 = arith.constant 0 : index
    %c0_71 = arith.constant 0 : index
    %90 = vector.load %arg6[%c1_69, %c0_70, %c0_71] : memref<3x1x128xf32, #tpu.memory_space<vmem>>, vector<1x1x128xf32>
    %91 = vector.shape_cast %90 : vector<1x1x128xf32> to vector<1x128xf32>
    %cst_72 = arith.constant 9.99999974E-6 : f32
    %92 = vector.broadcast %cst_72 : f32 to vector<1x128xf32>
    %93 = arith.addf %89, %92 : vector<1x128xf32>
    %94 = math.rsqrt %93 : vector<1x128xf32>
    %95 = arith.mulf %91, %94 : vector<1x128xf32>
    %96 = vector.broadcast %82 : vector<1x128xf32> to vector<8x128xf32>
    %97 = arith.subf %78, %96 : vector<8x128xf32>
    %98 = vector.broadcast %95 : vector<1x128xf32> to vector<8x128xf32>
    %99 = arith.mulf %97, %98 : vector<8x128xf32>
    %c2_73 = arith.constant 2 : index
    %c0_74 = arith.constant 0 : index
    %c0_75 = arith.constant 0 : index
    %100 = vector.load %arg6[%c2_73, %c0_74, %c0_75] : memref<3x1x128xf32, #tpu.memory_space<vmem>>, vector<1x1x128xf32>
    %101 = vector.shape_cast %100 : vector<1x1x128xf32> to vector<1x128xf32>
    %102 = vector.broadcast %101 : vector<1x128xf32> to vector<8x128xf32>
    %103 = arith.addf %99, %102 : vector<8x128xf32>
    %cst_76 = arith.constant 0.000000e+00 : f32
    %104 = vector.broadcast %cst_76 : f32 to vector<8x128xf32>
    %105 = arith.cmpf oge, %103, %104 : vector<8x128xf32>
    %cst_77 = arith.constant 0.00999999977 : f32
    %106 = vector.broadcast %cst_77 : f32 to vector<8x128xf32>
    %107 = arith.mulf %106, %103 : vector<8x128xf32>
    %108 = arith.select %105, %103, %107 : vector<8x128xi1>, vector<8x128xf32>
    %c0_78 = arith.constant 0 : index
    %c0_79 = arith.constant 0 : index
    %c0_80 = arith.constant 0 : index
    %109 = vector.load %arg9[%c0_78, %c0_79, %c0_80] : memref<3x1x256xf32, #tpu.memory_space<vmem>>, vector<1x1x256xf32>
    %110 = vector.shape_cast %109 : vector<1x1x256xf32> to vector<1x256xf32>
    %c0_81 = arith.constant 0 : index
    %c0_82 = arith.constant 0 : index
    %c0_83 = arith.constant 0 : index
    %111 = vector.load %arg8[%c0_81, %c0_82, %c0_83] : memref<3x4x8xf32, #tpu.memory_space<vmem>>, vector<1x4x8xf32>
    %112 = vector.shape_cast %111 : vector<1x4x8xf32> to vector<4x8xf32>
    %cst_84 = arith.constant dense<0.000000e+00> : vector<4x128xf32>
    %113 = tpu.matmul %112, %108, %cst_84 {dimension_numbers = #tpu.dot_dimension_numbers<[1], [0], [0], [1], [0, 0, 1, 1], [], []>} : vector<4x8xf32>, vector<8x128xf32>, vector<4x128xf32> -> vector<4x128xf32>
    %c0_85 = arith.constant 0 : index
    %c0_86 = arith.constant 0 : index
    %c0_87 = arith.constant 0 : index
    %114 = vector.load %arg7[%c0_85, %c0_86, %c0_87] : memref<3x128x256xf32, #tpu.memory_space<vmem>>, vector<1x128x256xf32>
    %115 = vector.shape_cast %114 : vector<1x128x256xf32> to vector<128x256xf32>
    %cst_88 = arith.constant dense<0.000000e+00> : vector<4x256xf32>
    %116 = tpu.matmul %113, %115, %cst_88 {dimension_numbers = #tpu.dot_dimension_numbers<[1], [0], [0], [1], [0, 0, 1, 1], [], []>} : vector<4x128xf32>, vector<128x256xf32>, vector<4x256xf32> -> vector<4x256xf32>
    %117 = vector.broadcast %110 : vector<1x256xf32> to vector<4x256xf32>
    %118 = arith.addf %117, %116 : vector<4x256xf32>
    %c1_89 = arith.constant 1 : index
    %c0_90 = arith.constant 0 : index
    %c0_91 = arith.constant 0 : index
    %119 = vector.load %arg8[%c1_89, %c0_90, %c0_91] : memref<3x4x8xf32, #tpu.memory_space<vmem>>, vector<1x4x8xf32>
    %120 = vector.shape_cast %119 : vector<1x4x8xf32> to vector<4x8xf32>
    %cst_92 = arith.constant dense<0.000000e+00> : vector<4x128xf32>
    %121 = tpu.matmul %120, %108, %cst_92 {dimension_numbers = #tpu.dot_dimension_numbers<[1], [0], [0], [1], [0, 0, 1, 1], [], []>} : vector<4x8xf32>, vector<8x128xf32>, vector<4x128xf32> -> vector<4x128xf32>
    %c1_93 = arith.constant 1 : index
    %c0_94 = arith.constant 0 : index
    %c0_95 = arith.constant 0 : index
    %122 = vector.load %arg7[%c1_93, %c0_94, %c0_95] : memref<3x128x256xf32, #tpu.memory_space<vmem>>, vector<1x128x256xf32>
    %123 = vector.shape_cast %122 : vector<1x128x256xf32> to vector<128x256xf32>
    %cst_96 = arith.constant dense<0.000000e+00> : vector<4x256xf32>
    %124 = tpu.matmul %121, %123, %cst_96 {dimension_numbers = #tpu.dot_dimension_numbers<[1], [0], [0], [1], [0, 0, 1, 1], [], []>} : vector<4x128xf32>, vector<128x256xf32>, vector<4x256xf32> -> vector<4x256xf32>
    %125 = arith.addf %118, %124 : vector<4x256xf32>
    %c2_97 = arith.constant 2 : index
    %c0_98 = arith.constant 0 : index
    %c0_99 = arith.constant 0 : index
    %126 = vector.load %arg8[%c2_97, %c0_98, %c0_99] : memref<3x4x8xf32, #tpu.memory_space<vmem>>, vector<1x4x8xf32>
    %127 = vector.shape_cast %126 : vector<1x4x8xf32> to vector<4x8xf32>
    %cst_100 = arith.constant dense<0.000000e+00> : vector<4x128xf32>
    %128 = tpu.matmul %127, %108, %cst_100 {dimension_numbers = #tpu.dot_dimension_numbers<[1], [0], [0], [1], [0, 0, 1, 1], [], []>} : vector<4x8xf32>, vector<8x128xf32>, vector<4x128xf32> -> vector<4x128xf32>
    %c2_101 = arith.constant 2 : index
    %c0_102 = arith.constant 0 : index
    %c0_103 = arith.constant 0 : index
    %129 = vector.load %arg7[%c2_101, %c0_102, %c0_103] : memref<3x128x256xf32, #tpu.memory_space<vmem>>, vector<1x128x256xf32>
    %130 = vector.shape_cast %129 : vector<1x128x256xf32> to vector<128x256xf32>
    %cst_104 = arith.constant dense<0.000000e+00> : vector<4x256xf32>
    %131 = tpu.matmul %128, %130, %cst_104 {dimension_numbers = #tpu.dot_dimension_numbers<[1], [0], [0], [1], [0, 0, 1, 1], [], []>} : vector<4x128xf32>, vector<128x256xf32>, vector<4x256xf32> -> vector<4x256xf32>
    %132 = arith.addf %125, %131 : vector<4x256xf32>
    %cst_105 = arith.constant dense<0.000000e+00> : vector<256xf32>
    %133 = vector.multi_reduction <add>, %132, %cst_105 [0] : vector<4x256xf32> to vector<256xf32>
    %134 = vector.shape_cast %133 : vector<256xf32> to vector<1x256xf32>
    %cst_106 = arith.constant 2.500000e-01 : f32
    %135 = vector.broadcast %cst_106 : f32 to vector<1x256xf32>
    %136 = arith.mulf %134, %135 : vector<1x256xf32>
    %137 = arith.mulf %132, %132 : vector<4x256xf32>
    %cst_107 = arith.constant dense<0.000000e+00> : vector<256xf32>
    %138 = vector.multi_reduction <add>, %137, %cst_107 [0] : vector<4x256xf32> to vector<256xf32>
    %139 = vector.shape_cast %138 : vector<256xf32> to vector<1x256xf32>
    %cst_108 = arith.constant 2.500000e-01 : f32
    %140 = vector.broadcast %cst_108 : f32 to vector<1x256xf32>
    %141 = arith.mulf %139, %140 : vector<1x256xf32>
    %142 = arith.mulf %136, %136 : vector<1x256xf32>
    %143 = arith.subf %141, %142 : vector<1x256xf32>
    %c1_109 = arith.constant 1 : index
    %c0_110 = arith.constant 0 : index
    %c0_111 = arith.constant 0 : index
    %144 = vector.load %arg9[%c1_109, %c0_110, %c0_111] : memref<3x1x256xf32, #tpu.memory_space<vmem>>, vector<1x1x256xf32>
    %145 = vector.shape_cast %144 : vector<1x1x256xf32> to vector<1x256xf32>
    %cst_112 = arith.constant 9.99999974E-6 : f32
    %146 = vector.broadcast %cst_112 : f32 to vector<1x256xf32>
    %147 = arith.addf %143, %146 : vector<1x256xf32>
    %148 = math.rsqrt %147 : vector<1x256xf32>
    %149 = arith.mulf %145, %148 : vector<1x256xf32>
    %150 = vector.broadcast %136 : vector<1x256xf32> to vector<4x256xf32>
    %151 = arith.subf %132, %150 : vector<4x256xf32>
    %152 = vector.broadcast %149 : vector<1x256xf32> to vector<4x256xf32>
    %153 = arith.mulf %151, %152 : vector<4x256xf32>
    %c2_113 = arith.constant 2 : index
    %c0_114 = arith.constant 0 : index
    %c0_115 = arith.constant 0 : index
    %154 = vector.load %arg9[%c2_113, %c0_114, %c0_115] : memref<3x1x256xf32, #tpu.memory_space<vmem>>, vector<1x1x256xf32>
    %155 = vector.shape_cast %154 : vector<1x1x256xf32> to vector<1x256xf32>
    %156 = vector.broadcast %155 : vector<1x256xf32> to vector<4x256xf32>
    %157 = arith.addf %153, %156 : vector<4x256xf32>
    %cst_116 = arith.constant 0.000000e+00 : f32
    %158 = vector.broadcast %cst_116 : f32 to vector<4x256xf32>
    %159 = arith.cmpf oge, %157, %158 : vector<4x256xf32>
    %cst_117 = arith.constant 0.00999999977 : f32
    %160 = vector.broadcast %cst_117 : f32 to vector<4x256xf32>
    %161 = arith.mulf %160, %157 : vector<4x256xf32>
    %162 = arith.select %159, %157, %161 : vector<4x256xi1>, vector<4x256xf32>
    %c0_118 = arith.constant 0 : index
    %c0_119 = arith.constant 0 : index
    %163 = vector.load %arg10[%c0_118, %c0_119] : memref<1x32xf32, #tpu.memory_space<vmem>>, vector<1x32xf32>
    %c0_120 = arith.constant 0 : index
    %c0_121 = arith.constant 0 : index
    %c0_122 = arith.constant 0 : index
    %164 = vector.load %arg11[%c0_120, %c0_121, %c0_122] : memref<2x2x4xf32, #tpu.memory_space<vmem>>, vector<1x2x4xf32>
    %165 = vector.shape_cast %164 : vector<1x2x4xf32> to vector<2x4xf32>
    %cst_123 = arith.constant dense<0.000000e+00> : vector<2x256xf32>
    %166 = tpu.matmul %165, %162, %cst_123 {dimension_numbers = #tpu.dot_dimension_numbers<[1], [0], [0], [1], [0, 0, 1, 1], [], []>} : vector<2x4xf32>, vector<4x256xf32>, vector<2x256xf32> -> vector<2x256xf32>
    %c0_124 = arith.constant 0 : index
    %c0_125 = arith.constant 0 : index
    %c0_126 = arith.constant 0 : index
    %167 = vector.load %arg12[%c0_124, %c0_125, %c0_126] : memref<2x256x32xf32, #tpu.memory_space<vmem>>, vector<1x256x32xf32>
    %168 = vector.shape_cast %167 : vector<1x256x32xf32> to vector<256x32xf32>
    %cst_127 = arith.constant dense<0.000000e+00> : vector<2x32xf32>
    %169 = tpu.matmul %166, %168, %cst_127 {dimension_numbers = #tpu.dot_dimension_numbers<[1], [0], [0], [1], [0, 0, 1, 1], [], []>} : vector<2x256xf32>, vector<256x32xf32>, vector<2x32xf32> -> vector<2x32xf32>
    %170 = vector.broadcast %163 : vector<1x32xf32> to vector<2x32xf32>
    %171 = arith.addf %170, %169 : vector<2x32xf32>
    %c1_128 = arith.constant 1 : index
    %c0_129 = arith.constant 0 : index
    %c0_130 = arith.constant 0 : index
    %172 = vector.load %arg11[%c1_128, %c0_129, %c0_130] : memref<2x2x4xf32, #tpu.memory_space<vmem>>, vector<1x2x4xf32>
    %173 = vector.shape_cast %172 : vector<1x2x4xf32> to vector<2x4xf32>
    %cst_131 = arith.constant dense<0.000000e+00> : vector<2x256xf32>
    %174 = tpu.matmul %173, %162, %cst_131 {dimension_numbers = #tpu.dot_dimension_numbers<[1], [0], [0], [1], [0, 0, 1, 1], [], []>} : vector<2x4xf32>, vector<4x256xf32>, vector<2x256xf32> -> vector<2x256xf32>
    %c1_132 = arith.constant 1 : index
    %c0_133 = arith.constant 0 : index
    %c0_134 = arith.constant 0 : index
    %175 = vector.load %arg12[%c1_132, %c0_133, %c0_134] : memref<2x256x32xf32, #tpu.memory_space<vmem>>, vector<1x256x32xf32>
    %176 = vector.shape_cast %175 : vector<1x256x32xf32> to vector<256x32xf32>
    %cst_135 = arith.constant dense<0.000000e+00> : vector<2x32xf32>
    %177 = tpu.matmul %174, %176, %cst_135 {dimension_numbers = #tpu.dot_dimension_numbers<[1], [0], [0], [1], [0, 0, 1, 1], [], []>} : vector<2x256xf32>, vector<256x32xf32>, vector<2x32xf32> -> vector<2x32xf32>
    %178 = arith.addf %171, %177 : vector<2x32xf32>
    %c0_136 = arith.constant 0 : index
    %c0_137 = arith.constant 0 : index
    %179 = vector.load %arg13[%c0_136, %c0_137] : memref<2x32xf32, #tpu.memory_space<vmem>>, vector<2x32xf32>
    tpu.vector_store %arg13[%c0_136, %c0_137], %178 {strides = array<i32>} : memref<2x32xf32, #tpu.memory_space<vmem>>, vector<2x32xf32>,
    return
  }
}

</mosaic_0001>

<llo_original>
// kernel: forward.1
$region0: #{forward.1}
  #allocation0 [shape = 'u32[]', space=smem, size = 0x4, offset = 0x4, fixed_abs, tag = 'smem constant byte address 0x4 - core index']
  #allocation1 [shape = 'u32[72,128]{1,0:T(1,128)}', space=vmem, size = 0x9000, scoped, tag = 'internal scratch']
  %s0 = inlined_call_operand.vmem [shape: f32[32,4], index: 0, kind: input, shape index: {}]
  %s1 = inlined_call_operand.hbm [shape: f32[3,4,64], index: 1, kind: input, shape index: {}]
  %s2 = inlined_call_operand.hbm [shape: f32[3,16,32], index: 2, kind: input, shape index: {}]
  %s3 = inlined_call_operand.hbm [shape: f32[3,1,64], index: 3, kind: input, shape index: {}]
  %s4 = inlined_call_operand.hbm [shape: f32[3,64,128], index: 4, kind: input, shape index: {}]
  %s5 = inlined_call_operand.vmem [shape: f32[3,8,16], index: 5, kind: input, shape index: {}]
  %s6 = inlined_call_operand.hbm [shape: f32[3,1,128], index: 6, kind: input, shape index: {}]
  %s7 = inlined_call_operand.hbm [shape: f32[3,128,256], index: 7, kind: input, shape index: {}]
  %s8 = inlined_call_operand.vmem [shape: f32[3,4,8], index: 8, kind: input, shape index: {}]
  %s9 = inlined_call_operand.vmem [shape: f32[3,1,256], index: 9, kind: input, shape index: {}]
  %s10 = inlined_call_operand.vmem [shape: f32[1,32], index: 10, kind: input, shape index: {}]
  %s11 = inlined_call_operand.vmem [shape: f32[2,2,4], index: 11, kind: input, shape index: {}]
  %s12 = inlined_call_operand.hbm [shape: f32[2,256,32], index: 12, kind: input, shape index: {}]
  %s13 = inlined_call_operand.hbm [shape: f32[2,32], index: 13, kind: output, shape index: {}]
  %s14 = sld [smem:[#allocation0]]
  $region90: #{forward.1} parent=0
    _
  %s16 = ssub.s32 1, %s14
  %s17 = scalar_select 0, %s16, %s14
  $region1: #{forward.1} parent=0
    #allocation2 [shape = 'u8[6144]{0}', space=vmem, size = 0x1800, scoped, tag = 'input window, operand 1, single buffered']
    #allocation3 [shape = 's32[1]{0}', space=sflag, size = 0x4, scoped, tag = 'scoped memory for forward.1']
    #allocation4 [shape = 's32[1]{0}', space=sflag, size = 0x4, scoped, tag = 'scoped memory for forward.1']
    #allocation5 [shape = 'u8[24576]{0}', space=vmem, size = 0x6000, scoped, tag = 'input window, operand 2, single buffered']
    #allocation6 [shape = 's32[1]{0}', space=sflag, size = 0x4, scoped, tag = 'scoped memory for forward.1']
    #allocation7 [shape = 'u8[1536]{0}', space=vmem, size = 0x800, scoped, tag = 'input window, operand 3, single buffered']
    #allocation8 [shape = 'u8[98304]{0}', space=vmem, size = 0x18000, scoped, tag = 'input window, operand 4, single buffered']
    #allocation9 [shape = 's32[1]{0}', space=sflag, size = 0x4, scoped, tag = 'scoped memory for forward.1']
    #allocation10 [shape = 'u8[1536]{0}', space=vmem, size = 0x800, scoped, tag = 'input window, operand 6, single buffered']
    #allocation11 [shape = 'u8[393216]{0}', space=vmem, size = 0x60000, scoped, tag = 'input window, operand 7, single buffered']
    #allocation12 [shape = 's32[1]{0}', space=sflag, size = 0x4, scoped, tag = 'scoped memory for forward.1']
    #allocation13 [shape = 'u8[262144]{0}', space=vmem, size = 0x40000, scoped, tag = 'input window, operand 12, single buffered']
    #allocation14 [shape = 'u8[1024]{0}', space=vmem, size = 0x400, scoped, tag = 'output window, operand 0, single buffered']
    %18 = vsyncpa [#allocation3], 0
    %19 = vsyncpa [#allocation6], 0
    %20 = vsyncpa [#allocation9], 0
    %21 = vsyncpa [#allocation12], 0
    %22 = vsyncpa [#allocation4], 0
    // Predicated region
    $region2: #{forward.1} parent=1 // pred_check
      _
    $region3: #{forward.1} parent=1 // pred_check_branch
      %24 = sbr.rel (0) target = $region5
    $region4: #{forward.1} parent=1 // pred_region
      _
    $region5: #{forward.1} parent=1 // pred_fallthru
      _
    // Predicated region
    $region6: #{forward.1} parent=1 // pred_check
      _
    $region7: #{forward.1} parent=1 // pred_check_branch
      %26 = sbr.rel (0) target = $region9
    $region8: #{forward.1} parent=1 // pred_region
      %28 = vsyncadd [#allocation3], 0
      %s29 = sshll.u32 %s1, 4
      %s30 = int_to_ptr.hbm [resolvable:$true] %s29
      %s31 = sshll.u32 [#allocation2], 4
      %s32 = int_to_ptr.vmem [resolvable:$true] %s31
      %37 = dma.hbm_to_vmem [thread:$0]  %s30, 192, %s32, [#allocation3], 64, 64, 4
    $region9: #{forward.1} parent=1 // pred_fallthru
      _
    // Predicated region
    $region10: #{forward.1} parent=1 // pred_check
      _
    $region11: #{forward.1} parent=1 // pred_check_branch
      %39 = sbr.rel (0) target = $region13
    $region12: #{forward.1} parent=1 // pred_region
      %41 = vsyncadd [#allocation6], 0
      %s42 = sshll.u32 %s2, 4
      %s43 = int_to_ptr.hbm [resolvable:$true] %s42
      %s44 = sshll.u32 [#allocation5], 4
      %s45 = int_to_ptr.vmem [resolvable:$true] %s44
      %50 = dma.hbm_to_vmem [thread:$0]  %s43, 768, %s45, [#allocation6], 128, 128, 8
    $region13: #{forward.1} parent=1 // pred_fallthru
      _
    // Predicated region
    $region14: #{forward.1} parent=1 // pred_check
      _
    $region15: #{forward.1} parent=1 // pred_check_branch
      %52 = sbr.rel (0) target = $region17
    $region16: #{forward.1} parent=1 // pred_region
      %54 = vsyncadd [#allocation6], 0
      %s55 = sshll.u32 %s3, 4
      %s56 = int_to_ptr.hbm [resolvable:$true] %s55
      %s57 = sshll.u32 [#allocation7], 4
      %s58 = int_to_ptr.vmem [resolvable:$true] %s57
      %63 = dma.hbm_to_vmem [thread:$0]  %s56, 48, %s58, [#allocation6], 16, 16, 1
    $region17: #{forward.1} parent=1 // pred_fallthru
      _
    // Predicated region
    $region18: #{forward.1} parent=1 // pred_check
      _
    $region19: #{forward.1} parent=1 // pred_check_branch
      %65 = sbr.rel (0) target = $region21
    $region20: #{forward.1} parent=1 // pred_region
      %67 = vsyncadd [#allocation9], 0
      %s68 = sshll.u32 %s4, 4
      %s69 = int_to_ptr.hbm [resolvable:$true] %s68
      %s70 = sshll.u32 [#allocation8], 4
      %s71 = int_to_ptr.vmem [resolvable:$true] %s70
      %76 = dma.hbm_to_vmem [thread:$0]  %s69, 3072, %s71, [#allocation9], 128, 128, 8
    $region21: #{forward.1} parent=1 // pred_fallthru
      _
    // Predicated region
    $region22: #{forward.1} parent=1 // pred_check
      _
    $region23: #{forward.1} parent=1 // pred_check_branch
      %78 = sbr.rel (0) target = $region25
    $region24: #{forward.1} parent=1 // pred_region
      _
    $region25: #{forward.1} parent=1 // pred_fallthru
      _
    // Predicated region
    $region26: #{forward.1} parent=1 // pred_check
      _
    $region27: #{forward.1} parent=1 // pred_check_branch
      %80 = sbr.rel (0) target = $region29
    $region28: #{forward.1} parent=1 // pred_region
      %82 = vsyncadd [#allocation9], 0
      %s83 = sshll.u32 %s6, 4
      %s84 = int_to_ptr.hbm [resolvable:$true] %s83
      %s85 = sshll.u32 [#allocation10], 4
      %s86 = int_to_ptr.vmem [resolvable:$true] %s85
      %91 = dma.hbm_to_vmem [thread:$0]  %s84, 48, %s86, [#allocation9], 16, 16, 1
    $region29: #{forward.1} parent=1 // pred_fallthru
      _
    // Predicated region
    $region30: #{forward.1} parent=1 // pred_check
      _
    $region31: #{forward.1} parent=1 // pred_check_branch
      %93 = sbr.rel (0) target = $region33
    $region32: #{forward.1} parent=1 // pred_region
      %95 = vsyncadd [#allocation12], 0
      %s96 = sshll.u32 %s7, 4
      %s97 = int_to_ptr.hbm [resolvable:$true] %s96
      %s98 = sshll.u32 [#allocation11], 4
      %s99 = int_to_ptr.vmem [resolvable:$true] %s98
      %104 = dma.hbm_to_vmem [thread:$0]  %s97, 12288, %s99, [#allocation12], 256, 256, 16
    $region33: #{forward.1} parent=1 // pred_fallthru
      _
    // Predicated region
    $region34: #{forward.1} parent=1 // pred_check
      _
    $region35: #{forward.1} parent=1 // pred_check_branch
      %106 = sbr.rel (0) target = $region37
    $region36: #{forward.1} parent=1 // pred_region
      _
    $region37: #{forward.1} parent=1 // pred_fallthru
      _
    // Predicated region
    $region38: #{forward.1} parent=1 // pred_check
      _
    $region39: #{forward.1} parent=1 // pred_check_branch
      %108 = sbr.rel (0) target = $region41
    $region40: #{forward.1} parent=1 // pred_region
      _
    $region41: #{forward.1} parent=1 // pred_fallthru
      _
    // Predicated region
    $region42: #{forward.1} parent=1 // pred_check
      _
    $region43: #{forward.1} parent=1 // pred_check_branch
      %110 = sbr.rel (0) target = $region45
    $region44: #{forward.1} parent=1 // pred_region
      _
    $region45: #{forward.1} parent=1 // pred_fallthru
      _
    // Predicated region
    $region46: #{forward.1} parent=1 // pred_check
      _
    $region47: #{forward.1} parent=1 // pred_check_branch
      %112 = sbr.rel (0) target = $region49
    $region48: #{forward.1} parent=1 // pred_region
      _
    $region49: #{forward.1} parent=1 // pred_fallthru
      _
    // Predicated region
    $region50: #{forward.1} parent=1 // pred_check
      _
    $region51: #{forward.1} parent=1 // pred_check_branch
      %114 = sbr.rel (0) target = $region53
    $region52: #{forward.1} parent=1 // pred_region
      %116 = vsyncadd [#allocation12], 0
      %s117 = sshll.u32 %s12, 4
      %s118 = int_to_ptr.hbm [resolvable:$true] %s117
      %s119 = sshll.u32 [#allocation13], 4
      %s120 = int_to_ptr.vmem [resolvable:$true] %s119
      %125 = dma.hbm_to_vmem [thread:$0]  %s118, 8192, %s120, [#allocation12], 128, 128, 8
    $region53: #{forward.1} parent=1 // pred_fallthru
      _
    // Predicated region
    $region54: #{forward.1} parent=1 // pred_check
      _
    $region55: #{forward.1} parent=1 // pred_check_branch
      %127 = sbr.rel (0) target = $region57
    $region56: #{forward.1} parent=1 // pred_region
      %129 = dma.done [#allocation3], 192
    $region57: #{forward.1} parent=1 // pred_fallthru
      _
    // Predicated region
    $region58: #{forward.1} parent=1 // pred_check
      _
    $region59: #{forward.1} parent=1 // pred_check_branch
      %131 = sbr.rel (0) target = $region61
    $region60: #{forward.1} parent=1 // pred_region
      %133 = dma.done [#allocation6], 768
    $region61: #{forward.1} parent=1 // pred_fallthru
      _
    // Predicated region
    $region62: #{forward.1} parent=1 // pred_check
      _
    $region63: #{forward.1} parent=1 // pred_check_branch
      %135 = sbr.rel (0) target = $region65
    $region64: #{forward.1} parent=1 // pred_region
      %137 = dma.done [#allocation6], 48
    $region65: #{forward.1} parent=1 // pred_fallthru
      _
    // Predicated region
    $region66: #{forward.1} parent=1 // pred_check
      _
    $region67: #{forward.1} parent=1 // pred_check_branch
      %139 = sbr.rel (0) target = $region69
    $region68: #{forward.1} parent=1 // pred_region
      %141 = dma.done [#allocation9], 3072
    $region69: #{forward.1} parent=1 // pred_fallthru
      _
    // Predicated region
    $region70: #{forward.1} parent=1 // pred_check
      _
    $region71: #{forward.1} parent=1 // pred_check_branch
      %143 = sbr.rel (0) target = $region73
    $region72: #{forward.1} parent=1 // pred_region
      %145 = dma.done [#allocation9], 48
    $region73: #{forward.1} parent=1 // pred_fallthru
      _
    // Predicated region
    $region74: #{forward.1} parent=1 // pred_check
      _
    $region75: #{forward.1} parent=1 // pred_check_branch
      %147 = sbr.rel (0) target = $region77
    $region76: #{forward.1} parent=1 // pred_region
      %149 = dma.done [#allocation12], 12288
    $region77: #{forward.1} parent=1 // pred_fallthru
      _
    // Predicated region
    $region78: #{forward.1} parent=1 // pred_check
      _
    $region79: #{forward.1} parent=1 // pred_check_branch
      %151 = sbr.rel (0) target = $region81
    $region80: #{forward.1} parent=1 // pred_region
      %153 = dma.done [#allocation12], 8192
    $region81: #{forward.1} parent=1 // pred_fallthru
      _
    %v154 = vld [vmem:[%s0] sm:$0xff]
    %v155 = vld [vmem:[%s0 + $0x8] sm:$0xff]
    %v156 = vld [vmem:[%s0 + $0x10] sm:$0xff]
    %v157 = vld [vmem:[%s0 + $0x18] sm:$0xff]
    %v158 = vld [vmem:[#allocation7] sm:$0x1]
    %v159 = vld [vmem:[#allocation5] sm:$0xff]
    %v160 = vld [vmem:[#allocation5 + $0x8] sm:$0xff]
    %vm161 = vcmask 261120
    %v163 = vsel %vm161, %v159, 0
    %v166 = vsel %vm161, %v160, 0
    %168 = vmatpush.msra.mxu0 0.0
    %169 = vmatpush.msra.mxu0 0.0
    %170 = vmatpush.msra.mxu0 0.0
    %171 = vmatpush.msra.mxu0 0.0
    %172 = vmatpush.msra.mxu0 0.0
    %173 = vmatpush.msra.mxu0 0.0
    %174 = vmatpush.msra.mxu0 0.0
    %175 = vmatpush.msra.mxu0 0.0
    %176 = vmatpush.msra.mxu0 0.0
    %177 = vmatpush.msra.mxu0 0.0
    %178 = vmatpush.msra.mxu0 0.0
    %179 = vmatpush.msra.mxu0 0.0
    %180 = vmatpush.msra.mxu0 %v157
    %181 = vmatpush.msra.mxu0 %v156
    %182 = vmatpush.msra.mxu0 %v155
    %183 = vmatpush.msra.mxu0 %v154
    %184 = vmatmul.f32.gmra.mxu0 %v163
    %v185 = vpop.f32.mrf.mxu0
    %v186 = vadd.f32 0.0, %v185
    %187 = vmatmul.f32.gmra.mxu0 %v166
    %v188 = vpop.f32.mrf.mxu0
    %v189 = vadd.f32 0.0, %v188
    %190 = vdwg.mxu0
    %v191 = vld [vmem:[#allocation2] sm:$0xf]
    %vm192 = vcmask 31744
    %v194 = vsel %vm192, %v186, 0
    %v197 = vsel %vm192, %v189, 0
    %vm199 = vcmask 1043456
    %v201 = vsel %vm199, %v191, 0
    %203 = vmatpush.msra.mxu0 0.0
    %204 = vmatpush.msra.mxu0 0.0
    %205 = vmatpush.msra.mxu0 0.0
    %206 = vmatpush.msra.mxu0 0.0
    %207 = vmatpush.msra.mxu0 0.0
    %208 = vmatpush.msra.mxu0 0.0
    %209 = vmatpush.msra.mxu0 0.0
    %210 = vmatpush.msra.mxu0 0.0
    %211 = vmatpush.msra.mxu0 0.0
    %212 = vmatpush.msra.mxu0 0.0
    %213 = vmatpush.msra.mxu0 0.0
    %214 = vmatpush.msra.mxu0 0.0
    %215 = vmatpush.msra.mxu0 0.0
    %216 = vmatpush.msra.mxu0 0.0
    %217 = vmatpush.msra.mxu0 0.0
    %218 = vmatpush.msra.mxu0 %v201
    %219 = vmatmul.f32.gmra.mxu0 %v194
    %v220 = vpop.f32.mrf.mxu0
    %v221 = vadd.f32 0.0, %v220
    %222 = vmatmul.f32.gmra.mxu0 %v197
    %v223 = vpop.f32.mrf.mxu0
    %v224 = vadd.f32 0.0, %v223
    %225 = vdwg.mxu0
    %v227 = vperm.slane %v158, 0
    %v229 = vadd.f32 %v227, %v221
    %v230 = vadd.f32 %v227, %v224
    %s231 = scalar_lea.vmem [#allocation5], 16
    %v232 = vld [vmem:[%s231] sm:$0xff]
    %v233 = vld [vmem:[%s231 + $0x8] sm:$0xff]
    %v235 = vsel %vm161, %v232, 0
    %v238 = vsel %vm161, %v233, 0
    %240 = vmatpush.msra.mxu0 0.0
    %241 = vmatpush.msra.mxu0 0.0
    %242 = vmatpush.msra.mxu0 0.0
    %243 = vmatpush.msra.mxu0 0.0
    %244 = vmatpush.msra.mxu0 0.0
    %245 = vmatpush.msra.mxu0 0.0
    %246 = vmatpush.msra.mxu0 0.0
    %247 = vmatpush.msra.mxu0 0.0
    %248 = vmatpush.msra.mxu0 0.0
    %249 = vmatpush.msra.mxu0 0.0
    %250 = vmatpush.msra.mxu0 0.0
    %251 = vmatpush.msra.mxu0 0.0
    %252 = vmatpush.msra.mxu0 %v157
    %253 = vmatpush.msra.mxu0 %v156
    %254 = vmatpush.msra.mxu0 %v155
    %255 = vmatpush.msra.mxu0 %v154
    %256 = vmatmul.f32.gmra.mxu0 %v235
    %v257 = vpop.f32.mrf.mxu0
    %v258 = vadd.f32 0.0, %v257
    %259 = vmatmul.f32.gmra.mxu0 %v238
    %v260 = vpop.f32.mrf.mxu0
    %v261 = vadd.f32 0.0, %v260
    %262 = vdwg.mxu0
    %s263 = scalar_lea.vmem [#allocation2], 4
    %v264 = vld [vmem:[%s263] sm:$0xf]
    %v266 = vsel %vm192, %v258, 0
    %v269 = vsel %vm192, %v261, 0
    %v272 = vsel %vm199, %v264, 0
    %274 = vmatpush.msra.mxu0 0.0
    %275 = vmatpush.msra.mxu0 0.0
    %276 = vmatpush.msra.mxu0 0.0
    %277 = vmatpush.msra.mxu0 0.0
    %278 = vmatpush.msra.mxu0 0.0
    %279 = vmatpush.msra.mxu0 0.0
    %280 = vmatpush.msra.mxu0 0.0
    %281 = vmatpush.msra.mxu0 0.0
    %282 = vmatpush.msra.mxu0 0.0
    %283 = vmatpush.msra.mxu0 0.0
    %284 = vmatpush.msra.mxu0 0.0
    %285 = vmatpush.msra.mxu0 0.0
    %286 = vmatpush.msra.mxu0 0.0
    %287 = vmatpush.msra.mxu0 0.0
    %288 = vmatpush.msra.mxu0 0.0
    %289 = vmatpush.msra.mxu0 %v272
    %290 = vmatmul.f32.gmra.mxu0 %v266
    %v291 = vpop.f32.mrf.mxu0
    %v292 = vadd.f32 0.0, %v291
    %293 = vmatmul.f32.gmra.mxu0 %v269
    %v294 = vpop.f32.mrf.mxu0
    %v295 = vadd.f32 0.0, %v294
    %296 = vdwg.mxu0
    %v297 = vadd.f32 %v229, %v292
    %v298 = vadd.f32 %v230, %v295
    %s299 = scalar_lea.vmem [#allocation5], 32
    %v300 = vld [vmem:[%s299] sm:$0xff]
    %v301 = vld [vmem:[%s299 + $0x8] sm:$0xff]
    %v303 = vsel %vm161, %v300, 0
    %v306 = vsel %vm161, %v301, 0
    %308 = vmatpush.msra.mxu0 0.0
    %309 = vmatpush.msra.mxu0 0.0
    %310 = vmatpush.msra.mxu0 0.0
    %311 = vmatpush.msra.mxu0 0.0
    %312 = vmatpush.msra.mxu0 0.0
    %313 = vmatpush.msra.mxu0 0.0
    %314 = vmatpush.msra.mxu0 0.0
    %315 = vmatpush.msra.mxu0 0.0
    %316 = vmatpush.msra.mxu0 0.0
    %317 = vmatpush.msra.mxu0 0.0
    %318 = vmatpush.msra.mxu0 0.0
    %319 = vmatpush.msra.mxu0 0.0
    %320 = vmatpush.msra.mxu0 %v157
    %321 = vmatpush.msra.mxu0 %v156
    %322 = vmatpush.msra.mxu0 %v155
    %323 = vmatpush.msra.mxu0 %v154
    %324 = vmatmul.f32.gmra.mxu0 %v303
    %v325 = vpop.f32.mrf.mxu0
    %v326 = vadd.f32 0.0, %v325
    %327 = vmatmul.f32.gmra.mxu0 %v306
    %v328 = vpop.f32.mrf.mxu0
    %v329 = vadd.f32 0.0, %v328
    %330 = vdwg.mxu0
    %s331 = scalar_lea.vmem [#allocation2], 8
    %v332 = vld [vmem:[%s331] sm:$0xf]
    %v334 = vsel %vm192, %v326, 0
    %v337 = vsel %vm192, %v329, 0
    %v340 = vsel %vm199, %v332, 0
    %342 = vmatpush.msra.mxu0 0.0
    %343 = vmatpush.msra.mxu0 0.0
    %344 = vmatpush.msra.mxu0 0.0
    %345 = vmatpush.msra.mxu0 0.0
    %346 = vmatpush.msra.mxu0 0.0
    %347 = vmatpush.msra.mxu0 0.0
    %348 = vmatpush.msra.mxu0 0.0
    %349 = vmatpush.msra.mxu0 0.0
    %350 = vmatpush.msra.mxu0 0.0
    %351 = vmatpush.msra.mxu0 0.0
    %352 = vmatpush.msra.mxu0 0.0
    %353 = vmatpush.msra.mxu0 0.0
    %354 = vmatpush.msra.mxu0 0.0
    %355 = vmatpush.msra.mxu0 0.0
    %356 = vmatpush.msra.mxu0 0.0
    %357 = vmatpush.msra.mxu0 %v340
    %358 = vmatmul.f32.gmra.mxu0 %v334
    %v359 = vpop.f32.mrf.mxu0
    %v360 = vadd.f32 0.0, %v359
    %361 = vmatmul.f32.gmra.mxu0 %v337
    %v362 = vpop.f32.mrf.mxu0
    %v363 = vadd.f32 0.0, %v362
    %364 = vdwg.mxu0
    %v365 = vadd.f32 %v297, %v360
    %v366 = vadd.f32 %v298, %v363
    %vm367 = vcmask 523264
    %v368 = vsel %vm367, %v365, 0.0
    %v369 = vsel %vm367, %v366, 0.0
    %v370 = vadd.f32 %v368, %v369
    %v371 = vrot.slane %v370, 4
    %v372 = vadd.f32 %v370, %v371
    %v373 = vrot.slane %v372, 2
    %v374 = vadd.f32 %v372, %v373
    %v375 = vrot.slane %v374, 1
    %v376 = vadd.f32 %v374, %v375
    %v377 = vmul.f32 %v376, 0.0625
    %v378 = vmul.f32 %v365, %v365
    %v379 = vmul.f32 %v366, %v366
    %v380 = vsel %vm367, %v378, 0.0
    %v381 = vsel %vm367, %v379, 0.0
    %v382 = vadd.f32 %v380, %v381
    %v383 = vrot.slane %v382, 4
    %v384 = vadd.f32 %v382, %v383
    %v385 = vrot.slane %v384, 2
    %v386 = vadd.f32 %v384, %v385
    %v387 = vrot.slane %v386, 1
    %v388 = vadd.f32 %v386, %v387
    %v389 = vmul.f32 %v388, 0.0625
    %v390 = vmul.f32 %v377, %v377
    %v391 = vsub.f32 %v389, %v390
    %s392 = scalar_lea.vmem [#allocation7], 1
    %v393 = vld [vmem:[%s392] sm:$0x1]
    %v394 = vadd.f32 %v391, 1e-05
    %v395 = vrsqrt.pop %v394
    %v396 = vmul.f32 %v395, %v394
    %v397 = vmul.f32 %v396, %v395
    %v398 = vmul.f32 0.5, %v397
    %v399 = vsub.f32 1.5, %v398
    %v400 = vmul.f32 %v395, %v399
    %vm401 = vweird.f32 %v394
    %vm402 = vweird.f32 %v395
    %vm403 = vmor %vm401, %vm402
    %v404 = vsel %vm403, %v395, %v400
    %v405 = vmul.f32 %v393, %v404
    %v406 = vsub.f32 %v365, %v377
    %v407 = vsub.f32 %v366, %v377
    %v409 = vperm.slane %v405, 0
    %v411 = vmul.f32 %v406, %v409
    %v412 = vmul.f32 %v407, %v409
    %s413 = scalar_lea.vmem [#allocation7], 2
    %v414 = vld [vmem:[%s413] sm:$0x1]
    %v416 = vperm.slane %v414, 0
    %v418 = vadd.f32 %v411, %v416
    %v419 = vadd.f32 %v412, %v416
    %vm420 = vcmp.ge.f32.partialorder %v418, 0.0
    %vm421 = vcmp.ge.f32.partialorder %v419, 0.0
    %v422 = vmul.f32 %v418, 0.01
    %v423 = vmul.f32 %v419, 0.01
    %v424 = vsel %vm420, %v418, %v422
    %v425 = vsel %vm421, %v419, %v423
    %v426 = vld [vmem:[#allocation10] sm:$0x1]
    %v427 = vld [vmem:[%s5] sm:$0xff]
    %vm428 = vcmask 130048
    %v430 = vsel %vm428, %v427, 0
    %432 = vmatpush.msra.mxu0 0.0
    %433 = vmatpush.msra.mxu0 0.0
    %434 = vmatpush.msra.mxu0 0.0
    %435 = vmatpush.msra.mxu0 0.0
    %436 = vmatpush.msra.mxu0 0.0
    %437 = vmatpush.msra.mxu0 0.0
    %438 = vmatpush.msra.mxu0 0.0
    %439 = vmatpush.msra.mxu0 0.0
    %440 = vmatpush.msra.mxu0 0.0
    %441 = vmatpush.msra.mxu0 0.0
    %442 = vmatpush.msra.mxu0 0.0
    %443 = vmatpush.msra.mxu0 0.0
    %444 = vmatpush.msra.mxu0 0.0
    %445 = vmatpush.msra.mxu0 0.0
    %446 = vmatpush.msra.mxu0 %v425
    %447 = vmatpush.msra.mxu0 %v424
    %448 = vmatmul.f32.gmra.mxu0 %v430
    %v449 = vpop.f32.mrf.mxu0
    %v450 = vadd.f32 0.0, %v449
    %451 = vdwg.mxu0
    %v452 = vld [vmem:[#allocation8] sm:$0xff]
    %v453 = vld [vmem:[#allocation8 + $0x8] sm:$0xff]
    %v454 = vld [vmem:[#allocation8 + $0x10] sm:$0xff]
    %v455 = vld [vmem:[#allocation8 + $0x18] sm:$0xff]
    %v456 = vld [vmem:[#allocation8 + $0x20] sm:$0xff]
    %v457 = vld [vmem:[#allocation8 + $0x28] sm:$0xff]
    %v458 = vld [vmem:[#allocation8 + $0x30] sm:$0xff]
    %v459 = vld [vmem:[#allocation8 + $0x38] sm:$0xff]
    %v461 = vsel %vm367, %v450, 0
    %463 = vmatpush.msra.mxu0 0.0
    %464 = vmatpush.msra.mxu0 0.0
    %465 = vmatpush.msra.mxu0 0.0
    %466 = vmatpush.msra.mxu0 0.0
    %467 = vmatpush.msra.mxu0 0.0
    %468 = vmatpush.msra.mxu0 0.0
    %469 = vmatpush.msra.mxu0 0.0
    %470 = vmatpush.msra.mxu0 0.0
    %471 = vmatpush.msra.mxu0 %v459
    %472 = vmatpush.msra.mxu0 %v458
    %473 = vmatpush.msra.mxu0 %v457
    %474 = vmatpush.msra.mxu0 %v456
    %475 = vmatpush.msra.mxu0 %v455
    %476 = vmatpush.msra.mxu0 %v454
    %477 = vmatpush.msra.mxu0 %v453
    %478 = vmatpush.msra.mxu0 %v452
    %479 = vmatmul.f32.gmra.mxu0 %v461
    %v480 = vpop.f32.mrf.mxu0
    %v481 = vadd.f32 0.0, %v480
    %482 = vdwg.mxu0
    %v484 = vperm.slane %v426, 0
    %v486 = vadd.f32 %v484, %v481
    %s487 = scalar_lea.vmem %s5, 8
    %v488 = vld [vmem:[%s487] sm:$0xff]
    %v490 = vsel %vm428, %v488, 0
    %492 = vmatpush.msra.mxu0 0.0
    %493 = vmatpush.msra.mxu0 0.0
    %494 = vmatpush.msra.mxu0 0.0
    %495 = vmatpush.msra.mxu0 0.0
    %496 = vmatpush.msra.mxu0 0.0
    %497 = vmatpush.msra.mxu0 0.0
    %498 = vmatpush.msra.mxu0 0.0
    %499 = vmatpush.msra.mxu0 0.0
    %500 = vmatpush.msra.mxu0 0.0
    %501 = vmatpush.msra.mxu0 0.0
    %502 = vmatpush.msra.mxu0 0.0
    %503 = vmatpush.msra.mxu0 0.0
    %504 = vmatpush.msra.mxu0 0.0
    %505 = vmatpush.msra.mxu0 0.0
    %506 = vmatpush.msra.mxu0 %v425
    %507 = vmatpush.msra.mxu0 %v424
    %508 = vmatmul.f32.gmra.mxu0 %v490
    %v509 = vpop.f32.mrf.mxu0
    %v510 = vadd.f32 0.0, %v509
    %511 = vdwg.mxu0
    %s512 = scalar_lea.vmem [#allocation8], 64
    %v513 = vld [vmem:[%s512] sm:$0xff]
    %v514 = vld [vmem:[%s512 + $0x8] sm:$0xff]
    %v515 = vld [vmem:[%s512 + $0x10] sm:$0xff]
    %v516 = vld [vmem:[%s512 + $0x18] sm:$0xff]
    %v517 = vld [vmem:[%s512 + $0x20] sm:$0xff]
    %v518 = vld [vmem:[%s512 + $0x28] sm:$0xff]
    %v519 = vld [vmem:[%s512 + $0x30] sm:$0xff]
    %v520 = vld [vmem:[%s512 + $0x38] sm:$0xff]
    %v522 = vsel %vm367, %v510, 0
    %524 = vmatpush.msra.mxu0 0.0
    %525 = vmatpush.msra.mxu0 0.0
    %526 = vmatpush.msra.mxu0 0.0
    %527 = vmatpush.msra.mxu0 0.0
    %528 = vmatpush.msra.mxu0 0.0
    %529 = vmatpush.msra.mxu0 0.0
    %530 = vmatpush.msra.mxu0 0.0
    %531 = vmatpush.msra.mxu0 0.0
    %532 = vmatpush.msra.mxu0 %v520
    %533 = vmatpush.msra.mxu0 %v519
    %534 = vmatpush.msra.mxu0 %v518
    %535 = vmatpush.msra.mxu0 %v517
    %536 = vmatpush.msra.mxu0 %v516
    %537 = vmatpush.msra.mxu0 %v515
    %538 = vmatpush.msra.mxu0 %v514
    %539 = vmatpush.msra.mxu0 %v513
    %540 = vmatmul.f32.gmra.mxu0 %v522
    %v541 = vpop.f32.mrf.mxu0
    %v542 = vadd.f32 0.0, %v541
    %543 = vdwg.mxu0
    %v544 = vadd.f32 %v486, %v542
    %s545 = scalar_lea.vmem %s5, 16
    %v546 = vld [vmem:[%s545] sm:$0xff]
    %v548 = vsel %vm428, %v546, 0
    %550 = vmatpush.msra.mxu0 0.0
    %551 = vmatpush.msra.mxu0 0.0
    %552 = vmatpush.msra.mxu0 0.0
    %553 = vmatpush.msra.mxu0 0.0
    %554 = vmatpush.msra.mxu0 0.0
    %555 = vmatpush.msra.mxu0 0.0
    %556 = vmatpush.msra.mxu0 0.0
    %557 = vmatpush.msra.mxu0 0.0
    %558 = vmatpush.msra.mxu0 0.0
    %559 = vmatpush.msra.mxu0 0.0
    %560 = vmatpush.msra.mxu0 0.0
    %561 = vmatpush.msra.mxu0 0.0
    %562 = vmatpush.msra.mxu0 0.0
    %563 = vmatpush.msra.mxu0 0.0
    %564 = vmatpush.msra.mxu0 %v425
    %565 = vmatpush.msra.mxu0 %v424
    %566 = vmatmul.f32.gmra.mxu0 %v548
    %v567 = vpop.f32.mrf.mxu0
    %v568 = vadd.f32 0.0, %v567
    %569 = vdwg.mxu0
    %s570 = scalar_lea.vmem [#allocation8], 128
    %v571 = vld [vmem:[%s570] sm:$0xff]
    %v572 = vld [vmem:[%s570 + $0x8] sm:$0xff]
    %v573 = vld [vmem:[%s570 + $0x10] sm:$0xff]
    %v574 = vld [vmem:[%s570 + $0x18] sm:$0xff]
    %v575 = vld [vmem:[%s570 + $0x20] sm:$0xff]
    %v576 = vld [vmem:[%s570 + $0x28] sm:$0xff]
    %v577 = vld [vmem:[%s570 + $0x30] sm:$0xff]
    %v578 = vld [vmem:[%s570 + $0x38] sm:$0xff]
    %v580 = vsel %vm367, %v568, 0
    %582 = vmatpush.msra.mxu0 0.0
    %583 = vmatpush.msra.mxu0 0.0
    %584 = vmatpush.msra.mxu0 0.0
    %585 = vmatpush.msra.mxu0 0.0
    %586 = vmatpush.msra.mxu0 0.0
    %587 = vmatpush.msra.mxu0 0.0
    %588 = vmatpush.msra.mxu0 0.0
    %589 = vmatpush.msra.mxu0 0.0
    %590 = vmatpush.msra.mxu0 %v578
    %591 = vmatpush.msra.mxu0 %v577
    %592 = vmatpush.msra.mxu0 %v576
    %593 = vmatpush.msra.mxu0 %v575
    %594 = vmatpush.msra.mxu0 %v574
    %595 = vmatpush.msra.mxu0 %v573
    %596 = vmatpush.msra.mxu0 %v572
    %597 = vmatpush.msra.mxu0 %v571
    %598 = vmatmul.f32.gmra.mxu0 %v580
    %v599 = vpop.f32.mrf.mxu0
    %v600 = vadd.f32 0.0, %v599
    %601 = vdwg.mxu0
    %v602 = vadd.f32 %v544, %v600
    %v603 = vrot.slane %v602, 4
    %v604 = vadd.f32 %v602, %v603
    %v605 = vrot.slane %v604, 2
    %v606 = vadd.f32 %v604, %v605
    %v607 = vrot.slane %v606, 1
    %v608 = vadd.f32 %v606, %v607
    %v609 = vmul.f32 %v608, 0.125
    %v610 = vmul.f32 %v602, %v602
    %v611 = vrot.slane %v610, 4
    %v612 = vadd.f32 %v610, %v611
    %v613 = vrot.slane %v612, 2
    %v614 = vadd.f32 %v612, %v613
    %v615 = vrot.slane %v614, 1
    %v616 = vadd.f32 %v614, %v615
    %v617 = vmul.f32 %v616, 0.125
    %v618 = vmul.f32 %v609, %v609
    %v619 = vsub.f32 %v617, %v618
    %s620 = scalar_lea.vmem [#allocation10], 1
    %v621 = vld [vmem:[%s620] sm:$0x1]
    %v622 = vadd.f32 %v619, 1e-05
    %v623 = vrsqrt.pop %v622
    %v624 = vmul.f32 %v623, %v622
    %v625 = vmul.f32 %v624, %v623
    %v626 = vmul.f32 0.5, %v625
    %v627 = vsub.f32 1.5, %v626
    %v628 = vmul.f32 %v623, %v627
    %vm629 = vweird.f32 %v622
    %vm630 = vweird.f32 %v623
    %vm631 = vmor %vm629, %vm630
    %v632 = vsel %vm631, %v623, %v628
    %v633 = vmul.f32 %v621, %v632
    %v634 = vsub.f32 %v602, %v609
    %v636 = vperm.slane %v633, 0
    %v638 = vmul.f32 %v634, %v636
    %s639 = scalar_lea.vmem [#allocation10], 2
    %v640 = vld [vmem:[%s639] sm:$0x1]
    %v642 = vperm.slane %v640, 0
    %v644 = vadd.f32 %v638, %v642
    %vm645 = vcmp.ge.f32.partialorder %v644, 0.0
    %v646 = vmul.f32 %v644, 0.01
    %v647 = vsel %vm645, %v644, %v646
    %v648 = vld [vmem:[%s9] sm:$0x3]
    %v649 = vld [vmem:[%s8] sm:$0xf]
    %vm650 = vcmask 64512
    %v652 = vsel %vm650, %v649, 0
    %654 = vmatpush.msra.mxu0 0.0
    %655 = vmatpush.msra.mxu0 0.0
    %656 = vmatpush.msra.mxu0 0.0
    %657 = vmatpush.msra.mxu0 0.0
    %658 = vmatpush.msra.mxu0 0.0
    %659 = vmatpush.msra.mxu0 0.0
    %660 = vmatpush.msra.mxu0 0.0
    %661 = vmatpush.msra.mxu0 0.0
    %662 = vmatpush.msra.mxu0 0.0
    %663 = vmatpush.msra.mxu0 0.0
    %664 = vmatpush.msra.mxu0 0.0
    %665 = vmatpush.msra.mxu0 0.0
    %666 = vmatpush.msra.mxu0 0.0
    %667 = vmatpush.msra.mxu0 0.0
    %668 = vmatpush.msra.mxu0 0.0
    %669 = vmatpush.msra.mxu0 %v647
    %670 = vmatmul.f32.gmra.mxu0 %v652
    %v671 = vpop.f32.mrf.mxu0
    %v672 = vadd.f32 0.0, %v671
    %673 = vdwg.mxu0
    %v674 = vld [vmem:[#allocation11] sm:$0xff]
    %v675 = vld [vmem:[#allocation11 + $0x8] sm:$0xff]
    %v676 = vld [vmem:[#allocation11 + $0x10] sm:$0xff]
    %v677 = vld [vmem:[#allocation11 + $0x18] sm:$0xff]
    %v678 = vld [vmem:[#allocation11 + $0x20] sm:$0xff]
    %v679 = vld [vmem:[#allocation11 + $0x28] sm:$0xff]
    %v680 = vld [vmem:[#allocation11 + $0x30] sm:$0xff]
    %v681 = vld [vmem:[#allocation11 + $0x38] sm:$0xff]
    %v682 = vld [vmem:[#allocation11 + $0x40] sm:$0xff]
    %v683 = vld [vmem:[#allocation11 + $0x48] sm:$0xff]
    %v684 = vld [vmem:[#allocation11 + $0x50] sm:$0xff]
    %v685 = vld [vmem:[#allocation11 + $0x58] sm:$0xff]
    %v686 = vld [vmem:[#allocation11 + $0x60] sm:$0xff]
    %v687 = vld [vmem:[#allocation11 + $0x68] sm:$0xff]
    %v688 = vld [vmem:[#allocation11 + $0x70] sm:$0xff]
    %v689 = vld [vmem:[#allocation11 + $0x78] sm:$0xff]
    %v690 = vld [vmem:[#allocation11 + $0x80] sm:$0xff]
    %v691 = vld [vmem:[#allocation11 + $0x88] sm:$0xff]
    %v692 = vld [vmem:[#allocation11 + $0x90] sm:$0xff]
    %v693 = vld [vmem:[#allocation11 + $0x98] sm:$0xff]
    %v694 = vld [vmem:[#allocation11 + $0xa0] sm:$0xff]
    %v695 = vld [vmem:[#allocation11 + $0xa8] sm:$0xff]
    %v696 = vld [vmem:[#allocation11 + $0xb0] sm:$0xff]
    %v697 = vld [vmem:[#allocation11 + $0xb8] sm:$0xff]
    %v698 = vld [vmem:[#allocation11 + $0xc0] sm:$0xff]
    %v699 = vld [vmem:[#allocation11 + $0xc8] sm:$0xff]
    %v700 = vld [vmem:[#allocation11 + $0xd0] sm:$0xff]
    %v701 = vld [vmem:[#allocation11 + $0xd8] sm:$0xff]
    %v702 = vld [vmem:[#allocation11 + $0xe0] sm:$0xff]
    %v703 = vld [vmem:[#allocation11 + $0xe8] sm:$0xff]
    %v704 = vld [vmem:[#allocation11 + $0xf0] sm:$0xff]
    %v705 = vld [vmem:[#allocation11 + $0xf8] sm:$0xff]
    %706 = vmatpush.msra.mxu0 %v704
    %707 = vmatpush.msra.mxu0 %v702
    %708 = vmatpush.msra.mxu0 %v700
    %709 = vmatpush.msra.mxu0 %v698
    %710 = vmatpush.msra.mxu0 %v696
    %711 = vmatpush.msra.mxu0 %v694
    %712 = vmatpush.msra.mxu0 %v692
    %713 = vmatpush.msra.mxu0 %v690
    %714 = vmatpush.msra.mxu0 %v688
    %715 = vmatpush.msra.mxu0 %v686
    %716 = vmatpush.msra.mxu0 %v684
    %717 = vmatpush.msra.mxu0 %v682
    %718 = vmatpush.msra.mxu0 %v680
    %719 = vmatpush.msra.mxu0 %v678
    %720 = vmatpush.msra.mxu0 %v676
    %721 = vmatpush.msra.mxu0 %v674
    %722 = vmatmul.f32.gmra.mxu0 %v672
    %v723 = vpop.f32.mrf.mxu0
    %v724 = vadd.f32 0.0, %v723
    %725 = vdwg.mxu0
    %726 = vmatpush.msra.mxu0 %v705
    %727 = vmatpush.msra.mxu0 %v703
    %728 = vmatpush.msra.mxu0 %v701
    %729 = vmatpush.msra.mxu0 %v699
    %730 = vmatpush.msra.mxu0 %v697
    %731 = vmatpush.msra.mxu0 %v695
    %732 = vmatpush.msra.mxu0 %v693
    %733 = vmatpush.msra.mxu0 %v691
    %734 = vmatpush.msra.mxu0 %v689
    %735 = vmatpush.msra.mxu0 %v687
    %736 = vmatpush.msra.mxu0 %v685
    %737 = vmatpush.msra.mxu0 %v683
    %738 = vmatpush.msra.mxu0 %v681
    %739 = vmatpush.msra.mxu0 %v679
    %740 = vmatpush.msra.mxu0 %v677
    %741 = vmatpush.msra.mxu0 %v675
    %742 = vmatmul.f32.gmra.mxu0 %v672
    %v743 = vpop.f32.mrf.mxu0
    %v744 = vadd.f32 0.0, %v743
    %745 = vdwg.mxu0
    %v747 = vperm.slane %v648, 0
    %v748 = vperm.slane %v648, 1
    %v751 = vadd.f32 %v747, %v724
    %v752 = vadd.f32 %v748, %v744
    %s753 = scalar_lea.vmem %s8, 4
    %v754 = vld [vmem:[%s753] sm:$0xf]
    %v756 = vsel %vm650, %v754, 0
    %758 = vmatpush.msra.mxu0 0.0
    %759 = vmatpush.msra.mxu0 0.0
    %760 = vmatpush.msra.mxu0 0.0
    %761 = vmatpush.msra.mxu0 0.0
    %762 = vmatpush.msra.mxu0 0.0
    %763 = vmatpush.msra.mxu0 0.0
    %764 = vmatpush.msra.mxu0 0.0
    %765 = vmatpush.msra.mxu0 0.0
    %766 = vmatpush.msra.mxu0 0.0
    %767 = vmatpush.msra.mxu0 0.0
    %768 = vmatpush.msra.mxu0 0.0
    %769 = vmatpush.msra.mxu0 0.0
    %770 = vmatpush.msra.mxu0 0.0
    %771 = vmatpush.msra.mxu0 0.0
    %772 = vmatpush.msra.mxu0 0.0
    %773 = vmatpush.msra.mxu0 %v647
    %774 = vmatmul.f32.gmra.mxu0 %v756
    %v775 = vpop.f32.mrf.mxu0
    %v776 = vadd.f32 0.0, %v775
    %777 = vdwg.mxu0
    %s778 = scalar_lea.vmem [#allocation11], 256
    %v779 = vld [vmem:[%s778] sm:$0xff]
    %v780 = vld [vmem:[%s778 + $0x8] sm:$0xff]
    %v781 = vld [vmem:[%s778 + $0x10] sm:$0xff]
    %v782 = vld [vmem:[%s778 + $0x18] sm:$0xff]
    %v783 = vld [vmem:[%s778 + $0x20] sm:$0xff]
    %v784 = vld [vmem:[%s778 + $0x28] sm:$0xff]
    %v785 = vld [vmem:[%s778 + $0x30] sm:$0xff]
    %v786 = vld [vmem:[%s778 + $0x38] sm:$0xff]
    %v787 = vld [vmem:[%s778 + $0x40] sm:$0xff]
    %v788 = vld [vmem:[%s778 + $0x48] sm:$0xff]
    %v789 = vld [vmem:[%s778 + $0x50] sm:$0xff]
    %v790 = vld [vmem:[%s778 + $0x58] sm:$0xff]
    %v791 = vld [vmem:[%s778 + $0x60] sm:$0xff]
    %v792 = vld [vmem:[%s778 + $0x68] sm:$0xff]
    %v793 = vld [vmem:[%s778 + $0x70] sm:$0xff]
    %v794 = vld [vmem:[%s778 + $0x78] sm:$0xff]
    %v795 = vld [vmem:[%s778 + $0x80] sm:$0xff]
    %v796 = vld [vmem:[%s778 + $0x88] sm:$0xff]
    %v797 = vld [vmem:[%s778 + $0x90] sm:$0xff]
    %v798 = vld [vmem:[%s778 + $0x98] sm:$0xff]
    %v799 = vld [vmem:[%s778 + $0xa0] sm:$0xff]
    %v800 = vld [vmem:[%s778 + $0xa8] sm:$0xff]
    %v801 = vld [vmem:[%s778 + $0xb0] sm:$0xff]
    %v802 = vld [vmem:[%s778 + $0xb8] sm:$0xff]
    %v803 = vld [vmem:[%s778 + $0xc0] sm:$0xff]
    %v804 = vld [vmem:[%s778 + $0xc8] sm:$0xff]
    %v805 = vld [vmem:[%s778 + $0xd0] sm:$0xff]
    %v806 = vld [vmem:[%s778 + $0xd8] sm:$0xff]
    %v807 = vld [vmem:[%s778 + $0xe0] sm:$0xff]
    %v808 = vld [vmem:[%s778 + $0xe8] sm:$0xff]
    %v809 = vld [vmem:[%s778 + $0xf0] sm:$0xff]
    %v810 = vld [vmem:[%s778 + $0xf8] sm:$0xff]
    %811 = vmatpush.msra.mxu0 %v809
    %812 = vmatpush.msra.mxu0 %v807
    %813 = vmatpush.msra.mxu0 %v805
    %814 = vmatpush.msra.mxu0 %v803
    %815 = vmatpush.msra.mxu0 %v801
    %816 = vmatpush.msra.mxu0 %v799
    %817 = vmatpush.msra.mxu0 %v797
    %818 = vmatpush.msra.mxu0 %v795
    %819 = vmatpush.msra.mxu0 %v793
    %820 = vmatpush.msra.mxu0 %v791
    %821 = vmatpush.msra.mxu0 %v789
    %822 = vmatpush.msra.mxu0 %v787
    %823 = vmatpush.msra.mxu0 %v785
    %824 = vmatpush.msra.mxu0 %v783
    %825 = vmatpush.msra.mxu0 %v781
    %826 = vmatpush.msra.mxu0 %v779
    %827 = vmatmul.f32.gmra.mxu0 %v776
    %v828 = vpop.f32.mrf.mxu0
    %v829 = vadd.f32 0.0, %v828
    %830 = vdwg.mxu0
    %831 = vmatpush.msra.mxu0 %v810
    %832 = vmatpush.msra.mxu0 %v808
    %833 = vmatpush.msra.mxu0 %v806
    %834 = vmatpush.msra.mxu0 %v804
    %835 = vmatpush.msra.mxu0 %v802
    %836 = vmatpush.msra.mxu0 %v800
    %837 = vmatpush.msra.mxu0 %v798
    %838 = vmatpush.msra.mxu0 %v796
    %839 = vmatpush.msra.mxu0 %v794
    %840 = vmatpush.msra.mxu0 %v792
    %841 = vmatpush.msra.mxu0 %v790
    %842 = vmatpush.msra.mxu0 %v788
    %843 = vmatpush.msra.mxu0 %v786
    %844 = vmatpush.msra.mxu0 %v784
    %845 = vmatpush.msra.mxu0 %v782
    %846 = vmatpush.msra.mxu0 %v780
    %847 = vmatmul.f32.gmra.mxu0 %v776
    %v848 = vpop.f32.mrf.mxu0
    %v849 = vadd.f32 0.0, %v848
    %850 = vdwg.mxu0
    %v851 = vadd.f32 %v751, %v829
    %v852 = vadd.f32 %v752, %v849
    %s853 = scalar_lea.vmem %s8, 8
    %v854 = vld [vmem:[%s853] sm:$0xf]
    %v856 = vsel %vm650, %v854, 0
    %858 = vmatpush.msra.mxu0 0.0
    %859 = vmatpush.msra.mxu0 0.0
    %860 = vmatpush.msra.mxu0 0.0
    %861 = vmatpush.msra.mxu0 0.0
    %862 = vmatpush.msra.mxu0 0.0
    %863 = vmatpush.msra.mxu0 0.0
    %864 = vmatpush.msra.mxu0 0.0
    %865 = vmatpush.msra.mxu0 0.0
    %866 = vmatpush.msra.mxu0 0.0
    %867 = vmatpush.msra.mxu0 0.0
    %868 = vmatpush.msra.mxu0 0.0
    %869 = vmatpush.msra.mxu0 0.0
    %870 = vmatpush.msra.mxu0 0.0
    %871 = vmatpush.msra.mxu0 0.0
    %872 = vmatpush.msra.mxu0 0.0
    %873 = vmatpush.msra.mxu0 %v647
    %874 = vmatmul.f32.gmra.mxu0 %v856
    %v875 = vpop.f32.mrf.mxu0
    %v876 = vadd.f32 0.0, %v875
    %877 = vdwg.mxu0
    %s878 = scalar_lea.vmem [#allocation11], 512
    %v879 = vld [vmem:[%s878] sm:$0xff]
    %v880 = vld [vmem:[%s878 + $0x8] sm:$0xff]
    %v881 = vld [vmem:[%s878 + $0x10] sm:$0xff]
    %v882 = vld [vmem:[%s878 + $0x18] sm:$0xff]
    %v883 = vld [vmem:[%s878 + $0x20] sm:$0xff]
    %v884 = vld [vmem:[%s878 + $0x28] sm:$0xff]
    %v885 = vld [vmem:[%s878 + $0x30] sm:$0xff]
    %v886 = vld [vmem:[%s878 + $0x38] sm:$0xff]
    %v887 = vld [vmem:[%s878 + $0x40] sm:$0xff]
    %v888 = vld [vmem:[%s878 + $0x48] sm:$0xff]
    %v889 = vld [vmem:[%s878 + $0x50] sm:$0xff]
    %v890 = vld [vmem:[%s878 + $0x58] sm:$0xff]
    %v891 = vld [vmem:[%s878 + $0x60] sm:$0xff]
    %v892 = vld [vmem:[%s878 + $0x68] sm:$0xff]
    %v893 = vld [vmem:[%s878 + $0x70] sm:$0xff]
    %v894 = vld [vmem:[%s878 + $0x78] sm:$0xff]
    %v895 = vld [vmem:[%s878 + $0x80] sm:$0xff]
    %v896 = vld [vmem:[%s878 + $0x88] sm:$0xff]
    %v897 = vld [vmem:[%s878 + $0x90] sm:$0xff]
    %v898 = vld [vmem:[%s878 + $0x98] sm:$0xff]
    %v899 = vld [vmem:[%s878 + $0xa0] sm:$0xff]
    %v900 = vld [vmem:[%s878 + $0xa8] sm:$0xff]
    %v901 = vld [vmem:[%s878 + $0xb0] sm:$0xff]
    %v902 = vld [vmem:[%s878 + $0xb8] sm:$0xff]
    %v903 = vld [vmem:[%s878 + $0xc0] sm:$0xff]
    %v904 = vld [vmem:[%s878 + $0xc8] sm:$0xff]
    %v905 = vld [vmem:[%s878 + $0xd0] sm:$0xff]
    %v906 = vld [vmem:[%s878 + $0xd8] sm:$0xff]
    %v907 = vld [vmem:[%s878 + $0xe0] sm:$0xff]
    %v908 = vld [vmem:[%s878 + $0xe8] sm:$0xff]
    %v909 = vld [vmem:[%s878 + $0xf0] sm:$0xff]
    %v910 = vld [vmem:[%s878 + $0xf8] sm:$0xff]
    %911 = vmatpush.msra.mxu0 %v909
    %912 = vmatpush.msra.mxu0 %v907
    %913 = vmatpush.msra.mxu0 %v905
    %914 = vmatpush.msra.mxu0 %v903
    %915 = vmatpush.msra.mxu0 %v901
    %916 = vmatpush.msra.mxu0 %v899
    %917 = vmatpush.msra.mxu0 %v897
    %918 = vmatpush.msra.mxu0 %v895
    %919 = vmatpush.msra.mxu0 %v893
    %920 = vmatpush.msra.mxu0 %v891
    %921 = vmatpush.msra.mxu0 %v889
    %922 = vmatpush.msra.mxu0 %v887
    %923 = vmatpush.msra.mxu0 %v885
    %924 = vmatpush.msra.mxu0 %v883
    %925 = vmatpush.msra.mxu0 %v881
    %926 = vmatpush.msra.mxu0 %v879
    %927 = vmatmul.f32.gmra.mxu0 %v876
    %v928 = vpop.f32.mrf.mxu0
    %v929 = vadd.f32 0.0, %v928
    %930 = vdwg.mxu0
    %931 = vmatpush.msra.mxu0 %v910
    %932 = vmatpush.msra.mxu0 %v908
    %933 = vmatpush.msra.mxu0 %v906
    %934 = vmatpush.msra.mxu0 %v904
    %935 = vmatpush.msra.mxu0 %v902
    %936 = vmatpush.msra.mxu0 %v900
    %937 = vmatpush.msra.mxu0 %v898
    %938 = vmatpush.msra.mxu0 %v896
    %939 = vmatpush.msra.mxu0 %v894
    %940 = vmatpush.msra.mxu0 %v892
    %941 = vmatpush.msra.mxu0 %v890
    %942 = vmatpush.msra.mxu0 %v888
    %943 = vmatpush.msra.mxu0 %v886
    %944 = vmatpush.msra.mxu0 %v884
    %945 = vmatpush.msra.mxu0 %v882
    %946 = vmatpush.msra.mxu0 %v880
    %947 = vmatmul.f32.gmra.mxu0 %v876
    %v948 = vpop.f32.mrf.mxu0
    %v949 = vadd.f32 0.0, %v948
    %950 = vdwg.mxu0
    %v951 = vadd.f32 %v851, %v929
    %v952 = vadd.f32 %v852, %v949
    %v953 = vsel %vm199, %v951, 0.0
    %v954 = vrot.slane %v953, 4
    %v955 = vadd.f32 %v953, %v954
    %v956 = vrot.slane %v955, 2
    %v957 = vadd.f32 %v955, %v956
    %v958 = vrot.slane %v957, 1
    %v959 = vadd.f32 %v957, %v958
    %v960 = vsel %vm199, %v952, 0.0
    %v961 = vrot.slane %v960, 4
    %v962 = vadd.f32 %v960, %v961
    %v963 = vrot.slane %v962, 2
    %v964 = vadd.f32 %v962, %v963
    %v965 = vrot.slane %v964, 1
    %v966 = vadd.f32 %v964, %v965
    %v967 = vmul.f32 %v959, 0.25
    %v968 = vmul.f32 %v966, 0.25
    %v969 = vmul.f32 %v951, %v951
    %v970 = vmul.f32 %v952, %v952
    %v971 = vsel %vm199, %v969, 0.0
    %v972 = vrot.slane %v971, 4
    %v973 = vadd.f32 %v971, %v972
    %v974 = vrot.slane %v973, 2
    %v975 = vadd.f32 %v973, %v974
    %v976 = vrot.slane %v975, 1
    %v977 = vadd.f32 %v975, %v976
    %v978 = vsel %vm199, %v970, 0.0
    %v979 = vrot.slane %v978, 4
    %v980 = vadd.f32 %v978, %v979
    %v981 = vrot.slane %v980, 2
    %v982 = vadd.f32 %v980, %v981
    %v983 = vrot.slane %v982, 1
    %v984 = vadd.f32 %v982, %v983
    %v985 = vmul.f32 %v977, 0.25
    %v986 = vmul.f32 %v984, 0.25
    %v987 = vmul.f32 %v967, %v967
    %v988 = vmul.f32 %v968, %v968
    %v989 = vsub.f32 %v985, %v987
    %v990 = vsub.f32 %v986, %v988
    %s991 = scalar_lea.vmem %s9, 2
    %v992 = vld [vmem:[%s991] sm:$0x3]
    %v993 = vadd.f32 %v989, 1e-05
    %v994 = vadd.f32 %v990, 1e-05
    %v995 = vrsqrt.pop %v993
    %v996 = vmul.f32 %v995, %v993
    %v997 = vmul.f32 %v996, %v995
    %v998 = vmul.f32 0.5, %v997
    %v999 = vsub.f32 1.5, %v998
    %v1000 = vmul.f32 %v995, %v999
    %vm1001 = vweird.f32 %v993
    %vm1002 = vweird.f32 %v995
    %vm1003 = vmor %vm1001, %vm1002
    %v1004 = vsel %vm1003, %v995, %v1000
    %v1005 = vrsqrt.pop %v994
    %v1006 = vmul.f32 %v1005, %v994
    %v1007 = vmul.f32 %v1006, %v1005
    %v1008 = vmul.f32 0.5, %v1007
    %v1009 = vsub.f32 1.5, %v1008
    %v1010 = vmul.f32 %v1005, %v1009
    %vm1011 = vweird.f32 %v994
    %vm1012 = vweird.f32 %v1005
    %vm1013 = vmor %vm1011, %vm1012
    %v1014 = vsel %vm1013, %v1005, %v1010
    %v1017 = vrot.slane %v1014, 7
    %vm1018 = vcmask 1040384
    %v1019 = vsel %vm1018, %v1004, %v1017
    %v1021 = vmul.f32 %v992, %v1019
    %v1022 = vsub.f32 %v951, %v967
    %v1023 = vsub.f32 %v952, %v968
    %v1025 = vperm.slane %v1021, 0
    %v1026 = vperm.slane %v1021, 1
    %v1029 = vmul.f32 %v1022, %v1025
    %v1030 = vmul.f32 %v1023, %v1026
    %s1031 = scalar_lea.vmem %s9, 4
    %v1032 = vld [vmem:[%s1031] sm:$0x3]
    %v1034 = vperm.slane %v1032, 0
    %v1035 = vperm.slane %v1032, 1
    %v1038 = vadd.f32 %v1029, %v1034
    %v1039 = vadd.f32 %v1030, %v1035
    %vm1040 = vcmp.ge.f32.partialorder %v1038, 0.0
    %vm1041 = vcmp.ge.f32.partialorder %v1039, 0.0
    %v1042 = vmul.f32 %v1038, 0.01
    %v1043 = vmul.f32 %v1039, 0.01
    %v1044 = vsel %vm1040, %v1038, %v1042
    %v1045 = vsel %vm1041, %v1039, %v1043
    %v1046 = vld [vmem:[%s10] sm:$0x1]
    %v1047 = vld [vmem:[%s11] sm:$0x3]
    %v1049 = vsel %vm192, %v1047, 0
    %v1052 = vsel %vm199, %v1044, 0
    %v1055 = vsel %vm199, %v1045, 0
    %1057 = vmatpush.msra.mxu0 0.0
    %1058 = vmatpush.msra.mxu0 0.0
    %1059 = vmatpush.msra.mxu0 0.0
    %1060 = vmatpush.msra.mxu0 0.0
    %1061 = vmatpush.msra.mxu0 0.0
    %1062 = vmatpush.msra.mxu0 0.0
    %1063 = vmatpush.msra.mxu0 0.0
    %1064 = vmatpush.msra.mxu0 0.0
    %1065 = vmatpush.msra.mxu0 0.0
    %1066 = vmatpush.msra.mxu0 0.0
    %1067 = vmatpush.msra.mxu0 0.0
    %1068 = vmatpush.msra.mxu0 0.0
    %1069 = vmatpush.msra.mxu0 0.0
    %1070 = vmatpush.msra.mxu0 0.0
    %1071 = vmatpush.msra.mxu0 0.0
    %1072 = vmatpush.msra.mxu0 %v1052
    %1073 = vmatmul.f32.gmra.mxu0 %v1049
    %v1074 = vpop.f32.mrf.mxu0
    %v1075 = vadd.f32 0.0, %v1074
    %1076 = vdwg.mxu0
    %1077 = vmatpush.msra.mxu0 0.0
    %1078 = vmatpush.msra.mxu0 0.0
    %1079 = vmatpush.msra.mxu0 0.0
    %1080 = vmatpush.msra.mxu0 0.0
    %1081 = vmatpush.msra.mxu0 0.0
    %1082 = vmatpush.msra.mxu0 0.0
    %1083 = vmatpush.msra.mxu0 0.0
    %1084 = vmatpush.msra.mxu0 0.0
    %1085 = vmatpush.msra.mxu0 0.0
    %1086 = vmatpush.msra.mxu0 0.0
    %1087 = vmatpush.msra.mxu0 0.0
    %1088 = vmatpush.msra.mxu0 0.0
    %1089 = vmatpush.msra.mxu0 0.0
    %1090 = vmatpush.msra.mxu0 0.0
    %1091 = vmatpush.msra.mxu0 0.0
    %1092 = vmatpush.msra.mxu0 %v1055
    %1093 = vmatmul.f32.gmra.mxu0 %v1049
    %v1094 = vpop.f32.mrf.mxu0
    %v1095 = vadd.f32 0.0, %v1094
    %1096 = vdwg.mxu0
    %v1097 = vld [vmem:[#allocation13] sm:$0xff]
    %v1098 = vld [vmem:[#allocation13 + $0x8] sm:$0xff]
    %v1099 = vld [vmem:[#allocation13 + $0x10] sm:$0xff]
    %v1100 = vld [vmem:[#allocation13 + $0x18] sm:$0xff]
    %v1101 = vld [vmem:[#allocation13 + $0x20] sm:$0xff]
    %v1102 = vld [vmem:[#allocation13 + $0x28] sm:$0xff]
    %v1103 = vld [vmem:[#allocation13 + $0x30] sm:$0xff]
    %v1104 = vld [vmem:[#allocation13 + $0x38] sm:$0xff]
    %v1105 = vld [vmem:[#allocation13 + $0x40] sm:$0xff]
    %v1106 = vld [vmem:[#allocation13 + $0x48] sm:$0xff]
    %v1107 = vld [vmem:[#allocation13 + $0x50] sm:$0xff]
    %v1108 = vld [vmem:[#allocation13 + $0x58] sm:$0xff]
    %v1109 = vld [vmem:[#allocation13 + $0x60] sm:$0xff]
    %v1110 = vld [vmem:[#allocation13 + $0x68] sm:$0xff]
    %v1111 = vld [vmem:[#allocation13 + $0x70] sm:$0xff]
    %v1112 = vld [vmem:[#allocation13 + $0x78] sm:$0xff]
    %v1113 = vld [vmem:[#allocation13 + $0x80] sm:$0xff]
    %v1114 = vld [vmem:[#allocation13 + $0x88] sm:$0xff]
    %v1115 = vld [vmem:[#allocation13 + $0x90] sm:$0xff]
    %v1116 = vld [vmem:[#allocation13 + $0x98] sm:$0xff]
    %v1117 = vld [vmem:[#allocation13 + $0xa0] sm:$0xff]
    %v1118 = vld [vmem:[#allocation13 + $0xa8] sm:$0xff]
    %v1119 = vld [vmem:[#allocation13 + $0xb0] sm:$0xff]
    %v1120 = vld [vmem:[#allocation13 + $0xb8] sm:$0xff]
    %v1121 = vld [vmem:[#allocation13 + $0xc0] sm:$0xff]
    %v1122 = vld [vmem:[#allocation13 + $0xc8] sm:$0xff]
    %v1123 = vld [vmem:[#allocation13 + $0xd0] sm:$0xff]
    %v1124 = vld [vmem:[#allocation13 + $0xd8] sm:$0xff]
    %v1125 = vld [vmem:[#allocation13 + $0xe0] sm:$0xff]
    %v1126 = vld [vmem:[#allocation13 + $0xe8] sm:$0xff]
    %v1127 = vld [vmem:[#allocation13 + $0xf0] sm:$0xff]
    %v1128 = vld [vmem:[#allocation13 + $0xf8] sm:$0xff]
    %1129 = vmatpush.msra.mxu0 %v1112
    %1130 = vmatpush.msra.mxu0 %v1111
    %1131 = vmatpush.msra.mxu0 %v1110
    %1132 = vmatpush.msra.mxu0 %v1109
    %1133 = vmatpush.msra.mxu0 %v1108
    %1134 = vmatpush.msra.mxu0 %v1107
    %1135 = vmatpush.msra.mxu0 %v1106
    %1136 = vmatpush.msra.mxu0 %v1105
    %1137 = vmatpush.msra.mxu0 %v1104
    %1138 = vmatpush.msra.mxu0 %v1103
    %1139 = vmatpush.msra.mxu0 %v1102
    %1140 = vmatpush.msra.mxu0 %v1101
    %1141 = vmatpush.msra.mxu0 %v1100
    %1142 = vmatpush.msra.mxu0 %v1099
    %1143 = vmatpush.msra.mxu0 %v1098
    %1144 = vmatpush.msra.mxu0 %v1097
    %1145 = vmatmul.f32.gmra.mxu0 %v1075
    %v1146 = vpop.f32.mrf.mxu0
    %v1147 = vadd.f32 0.0, %v1146
    %1148 = vdwg.mxu0
    %1149 = vmatpush.msra.mxu0 %v1128
    %1150 = vmatpush.msra.mxu0 %v1127
    %1151 = vmatpush.msra.mxu0 %v1126
    %1152 = vmatpush.msra.mxu0 %v1125
    %1153 = vmatpush.msra.mxu0 %v1124
    %1154 = vmatpush.msra.mxu0 %v1123
    %1155 = vmatpush.msra.mxu0 %v1122
    %1156 = vmatpush.msra.mxu0 %v1121
    %1157 = vmatpush.msra.mxu0 %v1120
    %1158 = vmatpush.msra.mxu0 %v1119
    %1159 = vmatpush.msra.mxu0 %v1118
    %1160 = vmatpush.msra.mxu0 %v1117
    %1161 = vmatpush.msra.mxu0 %v1116
    %1162 = vmatpush.msra.mxu0 %v1115
    %1163 = vmatpush.msra.mxu0 %v1114
    %1164 = vmatpush.msra.mxu0 %v1113
    %1165 = vmatmul.f32.gmra.mxu0 %v1095
    %v1166 = vpop.f32.mrf.mxu0
    %v1167 = vadd.f32 %v1147, %v1166
    %1168 = vdwg.mxu0
    %v1170 = vperm.slane %v1046, 0
    %v1172 = vadd.f32 %v1170, %v1167
    %s1173 = scalar_lea.vmem %s11, 2
    %v1174 = vld [vmem:[%s1173] sm:$0x3]
    %v1176 = vsel %vm192, %v1174, 0
    %1178 = vmatpush.msra.mxu0 0.0
    %1179 = vmatpush.msra.mxu0 0.0
    %1180 = vmatpush.msra.mxu0 0.0
    %1181 = vmatpush.msra.mxu0 0.0
    %1182 = vmatpush.msra.mxu0 0.0
    %1183 = vmatpush.msra.mxu0 0.0
    %1184 = vmatpush.msra.mxu0 0.0
    %1185 = vmatpush.msra.mxu0 0.0
    %1186 = vmatpush.msra.mxu0 0.0
    %1187 = vmatpush.msra.mxu0 0.0
    %1188 = vmatpush.msra.mxu0 0.0
    %1189 = vmatpush.msra.mxu0 0.0
    %1190 = vmatpush.msra.mxu0 0.0
    %1191 = vmatpush.msra.mxu0 0.0
    %1192 = vmatpush.msra.mxu0 0.0
    %1193 = vmatpush.msra.mxu0 %v1052
    %1194 = vmatmul.f32.gmra.mxu0 %v1176
    %v1195 = vpop.f32.mrf.mxu0
    %v1196 = vadd.f32 0.0, %v1195
    %1197 = vdwg.mxu0
    %1198 = vmatpush.msra.mxu0 0.0
    %1199 = vmatpush.msra.mxu0 0.0
    %1200 = vmatpush.msra.mxu0 0.0
    %1201 = vmatpush.msra.mxu0 0.0
    %1202 = vmatpush.msra.mxu0 0.0
    %1203 = vmatpush.msra.mxu0 0.0
    %1204 = vmatpush.msra.mxu0 0.0
    %1205 = vmatpush.msra.mxu0 0.0
    %1206 = vmatpush.msra.mxu0 0.0
    %1207 = vmatpush.msra.mxu0 0.0
    %1208 = vmatpush.msra.mxu0 0.0
    %1209 = vmatpush.msra.mxu0 0.0
    %1210 = vmatpush.msra.mxu0 0.0
    %1211 = vmatpush.msra.mxu0 0.0
    %1212 = vmatpush.msra.mxu0 0.0
    %1213 = vmatpush.msra.mxu0 %v1055
    %1214 = vmatmul.f32.gmra.mxu0 %v1176
    %v1215 = vpop.f32.mrf.mxu0
    %v1216 = vadd.f32 0.0, %v1215
    %1217 = vdwg.mxu0
    %s1218 = scalar_lea.vmem [#allocation13], 256
    %v1219 = vld [vmem:[%s1218] sm:$0xff]
    %v1220 = vld [vmem:[%s1218 + $0x8] sm:$0xff]
    %v1221 = vld [vmem:[%s1218 + $0x10] sm:$0xff]
    %v1222 = vld [vmem:[%s1218 + $0x18] sm:$0xff]
    %v1223 = vld [vmem:[%s1218 + $0x20] sm:$0xff]
    %v1224 = vld [vmem:[%s1218 + $0x28] sm:$0xff]
    %v1225 = vld [vmem:[%s1218 + $0x30] sm:$0xff]
    %v1226 = vld [vmem:[%s1218 + $0x38] sm:$0xff]
    %v1227 = vld [vmem:[%s1218 + $0x40] sm:$0xff]
    %v1228 = vld [vmem:[%s1218 + $0x48] sm:$0xff]
    %v1229 = vld [vmem:[%s1218 + $0x50] sm:$0xff]
    %v1230 = vld [vmem:[%s1218 + $0x58] sm:$0xff]
    %v1231 = vld [vmem:[%s1218 + $0x60] sm:$0xff]
    %v1232 = vld [vmem:[%s1218 + $0x68] sm:$0xff]
    %v1233 = vld [vmem:[%s1218 + $0x70] sm:$0xff]
    %v1234 = vld [vmem:[%s1218 + $0x78] sm:$0xff]
    %v1235 = vld [vmem:[%s1218 + $0x80] sm:$0xff]
    %v1236 = vld [vmem:[%s1218 + $0x88] sm:$0xff]
    %v1237 = vld [vmem:[%s1218 + $0x90] sm:$0xff]
    %v1238 = vld [vmem:[%s1218 + $0x98] sm:$0xff]
    %v1239 = vld [vmem:[%s1218 + $0xa0] sm:$0xff]
    %v1240 = vld [vmem:[%s1218 + $0xa8] sm:$0xff]
    %v1241 = vld [vmem:[%s1218 + $0xb0] sm:$0xff]
    %v1242 = vld [vmem:[%s1218 + $0xb8] sm:$0xff]
    %v1243 = vld [vmem:[%s1218 + $0xc0] sm:$0xff]
    %v1244 = vld [vmem:[%s1218 + $0xc8] sm:$0xff]
    %v1245 = vld [vmem:[%s1218 + $0xd0] sm:$0xff]
    %v1246 = vld [vmem:[%s1218 + $0xd8] sm:$0xff]
    %v1247 = vld [vmem:[%s1218 + $0xe0] sm:$0xff]
    %v1248 = vld [vmem:[%s1218 + $0xe8] sm:$0xff]
    %v1249 = vld [vmem:[%s1218 + $0xf0] sm:$0xff]
    %v1250 = vld [vmem:[%s1218 + $0xf8] sm:$0xff]
    %1251 = vmatpush.msra.mxu0 %v1234
    %1252 = vmatpush.msra.mxu0 %v1233
    %1253 = vmatpush.msra.mxu0 %v1232
    %1254 = vmatpush.msra.mxu0 %v1231
    %1255 = vmatpush.msra.mxu0 %v1230
    %1256 = vmatpush.msra.mxu0 %v1229
    %1257 = vmatpush.msra.mxu0 %v1228
    %1258 = vmatpush.msra.mxu0 %v1227
    %1259 = vmatpush.msra.mxu0 %v1226
    %1260 = vmatpush.msra.mxu0 %v1225
    %1261 = vmatpush.msra.mxu0 %v1224
    %1262 = vmatpush.msra.mxu0 %v1223
    %1263 = vmatpush.msra.mxu0 %v1222
    %1264 = vmatpush.msra.mxu0 %v1221
    %1265 = vmatpush.msra.mxu0 %v1220
    %1266 = vmatpush.msra.mxu0 %v1219
    %1267 = vmatmul.f32.gmra.mxu0 %v1196
    %v1268 = vpop.f32.mrf.mxu0
    %v1269 = vadd.f32 0.0, %v1268
    %1270 = vdwg.mxu0
    %1271 = vmatpush.msra.mxu0 %v1250
    %1272 = vmatpush.msra.mxu0 %v1249
    %1273 = vmatpush.msra.mxu0 %v1248
    %1274 = vmatpush.msra.mxu0 %v1247
    %1275 = vmatpush.msra.mxu0 %v1246
    %1276 = vmatpush.msra.mxu0 %v1245
    %1277 = vmatpush.msra.mxu0 %v1244
    %1278 = vmatpush.msra.mxu0 %v1243
    %1279 = vmatpush.msra.mxu0 %v1242
    %1280 = vmatpush.msra.mxu0 %v1241
    %1281 = vmatpush.msra.mxu0 %v1240
    %1282 = vmatpush.msra.mxu0 %v1239
    %1283 = vmatpush.msra.mxu0 %v1238
    %1284 = vmatpush.msra.mxu0 %v1237
    %1285 = vmatpush.msra.mxu0 %v1236
    %1286 = vmatpush.msra.mxu0 %v1235
    %1287 = vmatmul.f32.gmra.mxu0 %v1216
    %v1288 = vpop.f32.mrf.mxu0
    %v1289 = vadd.f32 %v1269, %v1288
    %1290 = vdwg.mxu0
    %v1291 = vadd.f32 %v1172, %v1289
    %vm1292 = vcmask 254976
    %1293 = vst.msk [vmem:[#allocation14] sm:$0x3] %vm1292, %v1291
    // Predicated region
    $region82: #{forward.1} parent=1 // pred_check
      _
    $region83: #{forward.1} parent=1 // pred_check_branch
      %1295 = sbr.rel (0) target = $region85
    $region84: #{forward.1} parent=1 // pred_region
      %1297 = vsyncadd [#allocation4], 0
      %s1299 = sshll.u32 [#allocation14], 4
      %s1300 = int_to_ptr.vmem [resolvable:$true] %s1299
      %s1301 = sshll.u32 %s13, 4
      %s1302 = int_to_ptr.hbm [resolvable:$true] %s1301
      %1304 = dma.vmem_to_hbm [thread:$0]  %s1300, 32, %s1302, [#allocation4]
    $region85: #{forward.1} parent=1 // pred_fallthru
      _
    // Predicated region
    $region86: #{forward.1} parent=1 // pred_check
      _
    $region87: #{forward.1} parent=1 // pred_check_branch
      %1306 = sbr.rel (0) target = $region89
    $region88: #{forward.1} parent=1 // pred_region
      %1308 = dma.done [#allocation4], 32
    $region89: #{forward.1} parent=1 // pred_fallthru
      _
    %1309 = vsyncpa [#allocation3], 1
    %1310 = vsyncpa [#allocation6], 1
    %1311 = vsyncpa [#allocation9], 1
    %1312 = vsyncpa [#allocation12], 1
    %1313 = vsyncpa [#allocation4], 1

</llo_original>
